<compile_context>
chip_gen: v5e
topology: v5e:2x2
jax: 0.10.0
libtpu: 0.0.40
codegen_flags: <defaults>
</compile_context>

<pallas_src>
import functools
from dataclasses import dataclass

import jax
import jax.numpy as jnp
from jax import lax
from jax.experimental import pallas as pl
from jax.experimental.pallas import tpu as pltpu


IGNORE = -100000.0  # matches the PyTorch IGNORE buffer


@dataclass(frozen=True)  # frozen -> hashable -> usable as a jit static arg
class Config:
    d_model: int = 32
    n_heads: int = 4
    d_head: int = 8
    init_range: float = 0.02
    use_bf16: bool = False  # bf16 MXU operands (f32 accum); loosens the 1e-5 match


def _decoder_attn_kernel(res_ref, enc_ref,
                         wq_ref, bq_ref, wk_ref, bk_ref, wv_ref, bv_ref,
                         wo_ref, bo_ref,
                         out_ref, pat_ref, *, n_heads, d_head, use_bf16):
    # res_ref / enc_ref : (S, D)      (batch dim squeezed by BlockSpec)
    # wq/wk/wv          : (H, D, K)   bq/bk/bv : (H, 1, K)
    # wo                : (H, K, D)   bo       : (1, D)
    # out_ref           : (S, D)      pat_ref  : (H, S, S)
    f32 = jnp.float32
    mm = jnp.bfloat16 if use_bf16 else f32
    H, K = n_heads, d_head
    S, D = enc_ref.shape

    enc = enc_ref[...].astype(mm)
    res = res_ref[...].astype(mm)

    # Head-major projections: ONE batched dot_general (batch dim = head) per
    # Q/K/V.  No per-head Python loop, no 8-lane sub-vreg slicing.
    enc_h = jnp.broadcast_to(enc[None], (H, S, D))
    res_h = jnp.broadcast_to(res[None], (H, S, D))

    q = jnp.einsum('hsd,hdk->hsk', enc_h, wq_ref[...].astype(mm),
                   preferred_element_type=f32) + bq_ref[...]
    k = jnp.einsum('hsd,hdk->hsk', enc_h, wk_ref[...].astype(mm),
                   preferred_element_type=f32) + bk_ref[...]
    v = jnp.einsum('hsd,hdk->hsk', res_h, wv_ref[...].astype(mm),
                   preferred_element_type=f32) + bv_ref[...]

    # Fold 1/sqrt(d_head) into q: one small (H,S,K) multiply instead of a full
    # (H,S,S) one on the scores.  (q*scale)@k.T == (q@k.T)*scale.
    q = q * (1.0 / (d_head ** 0.5))

    # All-head causal attention scores in a single batched MXU stream.
    scores = jnp.einsum('hqk,hpk->hqp', q.astype(mm), k.astype(mm),
                        preferred_element_type=f32)              # (H, S, S)
    rows = lax.broadcasted_iota(jnp.int32, (1, S, S), 1)
    cols = lax.broadcasted_iota(jnp.int32, (1, S, S), 2)
    scores = jnp.where(cols <= rows, scores, IGNORE)             # mask AFTER scaling

    # Numerically-stable softmax; divide via EUP reciprocal (exact -> still
    # matches the reference to 1e-5).
    m = jnp.max(scores, axis=-1, keepdims=True)
    e = jnp.exp(scores - m)
    p = e * pl.reciprocal(jnp.sum(e, axis=-1, keepdims=True), approx=False)
    pat_ref[...] = p.astype(pat_ref.dtype)

    # Per-head context and output projection: two batched dot_generals and a
    # single reduction over heads (no serialized per-head accumulation).
    z = jnp.einsum('hqp,hpk->hqk', p.astype(mm), v.astype(mm),
                   preferred_element_type=f32)                   # (H, S, K)
    outs = jnp.einsum('hqk,hkd->hqd', z.astype(mm), wo_ref[...].astype(mm),
                      preferred_element_type=f32)                # (H, S, D)
    out_ref[...] = (jnp.sum(outs, axis=0) + bo_ref[...]).astype(out_ref.dtype)


def decoder_attention(resid, enc, params, cfg: Config):
    """Fused DecoderAttention forward.  resid/enc: (B, S, d_model)."""
    assert resid.shape == enc.shape
    B, S, D = resid.shape
    H, K = cfg.n_heads, cfg.d_head
    Qs, Ks, Vs, O, Qbs, Kbs, Vbs, Ob = params

    bq = Qbs.reshape(H, 1, K)
    bk = Kbs.reshape(H, 1, K)
    bv = Vbs.reshape(H, 1, K)
    bo = Ob.reshape(1, D)

    kernel = functools.partial(_decoder_attn_kernel, n_heads=H, d_head=K,
                               use_bf16=cfg.use_bf16)

    itm = jnp.dtype(resid.dtype).itemsize
    flops = B * (3 * 2 * S * D * H * K        # QKV projections
                 + 2 * 2 * H * S * S * K      # scores + AV
                 + 2 * S * H * K * D)         # output projection
    bytes_accessed = (itm * 3 * B * S * D                             # resid, enc, out
                      + 4 * (3 * H * D * K + H * K * D + 3 * H * K + D)  # weights/biases
                      + 4 * B * H * S * S)                            # pattern (f32)
    cost = pl.CostEstimate(flops=flops, transcendentals=B * H * S * S,
                           bytes_accessed=bytes_accessed)

    const3 = lambda b: (0, 0, 0)
    const2 = lambda b: (0, 0)

    attn_out, attn_pattern = pl.pallas_call(
        kernel,
        out_shape=(jax.ShapeDtypeStruct((B, S, D), resid.dtype),
                   jax.ShapeDtypeStruct((B, H, S, S), jnp.float32)),
        grid_spec=pltpu.PrefetchScalarGridSpec(
            num_scalar_prefetch=0,
            grid=(B,),
            in_specs=[
                pl.BlockSpec((None, S, D), lambda b: (b, 0, 0)),   # resid
                pl.BlockSpec((None, S, D), lambda b: (b, 0, 0)),   # encoder_output
                pl.BlockSpec((H, D, K), const3),                   # Qs (VMEM-resident)
                pl.BlockSpec((H, 1, K), const3),                   # Qbs
                pl.BlockSpec((H, D, K), const3),                   # Ks
                pl.BlockSpec((H, 1, K), const3),                   # Kbs
                pl.BlockSpec((H, D, K), const3),                   # Vs
                pl.BlockSpec((H, 1, K), const3),                   # Vbs
                pl.BlockSpec((H, K, D), const3),                   # O
                pl.BlockSpec((1, D), const2),                      # Ob
            ],
            out_specs=[
                pl.BlockSpec((None, S, D), lambda b: (b, 0, 0)),        # attn_out
                pl.BlockSpec((None, H, S, S), lambda b: (b, 0, 0, 0)),  # attn_pattern
            ],
        ),
        compiler_params=pltpu.CompilerParams(
            dimension_semantics=("parallel",),
            vmem_limit_bytes=64 * 1024 * 1024,
        ),
        cost_estimate=cost,
    )(resid, enc, Qs, bq, Ks, bk, Vs, bv, O, bo)
    return attn_out, attn_pattern


@functools.partial(jax.jit, static_argnames=("cfg",))
def decoder_attention_forward(resid, enc, params, cfg: Config):
    return decoder_attention(resid, enc, params, cfg)


def init_params(cfg: Config, key):
    """Deterministic init matching the PyTorch module: normal(std=init_range)
    projection weights, zero biases."""
    kq, kk, kv, ko = jax.random.split(key, 4)
    H, D, K = cfg.n_heads, cfg.d_model, cfg.d_head
    s = cfg.init_range
    Qs = jax.random.normal(kq, (H, D, K), jnp.float32) * s
    Ks = jax.random.normal(kk, (H, D, K), jnp.float32) * s
    Vs = jax.random.normal(kv, (H, D, K), jnp.float32) * s
    O = jax.random.normal(ko, (H, K, D), jnp.float32) * s
    Qbs = jnp.zeros((H, K), jnp.float32)
    Kbs = jnp.zeros((H, K), jnp.float32)
    Vbs = jnp.zeros((H, K), jnp.float32)
    Ob = jnp.zeros((D,), jnp.float32)
    return (Qs, Ks, Vs, O, Qbs, Kbs, Vbs, Ob)


def decoder_attention_ref(resid, enc, params, cfg: Config):
    """Pure-JAX reference matching the PyTorch forward exactly."""
    Qs, Ks, Vs, O, Qbs, Kbs, Vbs, Ob = params
    q = jnp.einsum('bpd,hdk->bphk', enc, Qs) + Qbs
    k = jnp.einsum('bpd,hdk->bphk', enc, Ks) + Kbs
    v = jnp.einsum('bpd,hdk->bphk', resid, Vs) + Vbs
    scores = jnp.einsum('bQhk,bKhk->bhQK', q, k) / jnp.sqrt(jnp.float32(cfg.d_head))
    S = scores.shape[-1]
    mask = jnp.triu(jnp.ones((S, S), bool), k=1)
    scores = jnp.where(mask, IGNORE, scores)
    pattern = jax.nn.softmax(scores, axis=-1)
    z = jnp.einsum('bKhk,bhQK->bQhk', v, pattern)
    out = jnp.einsum('bQhk,hkd->bQd', z, O) + Ob
    return out, pattern


if __name__ == "__main__":
    cfg = Config(d_model=32, n_heads=4, d_head=8, init_range=0.02)
    key = jax.random.PRNGKey(0)
    key, kr, ke = jax.random.split(key, 3)

    batch, seq = 2, 8
    resid = jax.random.normal(kr, (batch, seq, cfg.d_model), jnp.float32)
    enc = jax.random.normal(ke, (batch, seq, cfg.d_model), jnp.float32)
    params = init_params(cfg, key)

    attn_out, attn_pattern = decoder_attention_forward(resid, enc, params, cfg)
    attn_out = jax.block_until_ready(attn_out)
    attn_pattern = jax.block_until_ready(attn_pattern)

    ref_out, ref_pat = decoder_attention_ref(resid, enc, params, cfg)
    assert attn_out.shape == (batch, seq, cfg.d_model)
    assert attn_pattern.shape == (batch, cfg.n_heads, seq, seq)
    assert jnp.allclose(attn_out, ref_out, atol=1e-5, rtol=1e-5)
    assert jnp.allclose(attn_pattern, ref_pat, atol=1e-5, rtol=1e-5)
    print("KERNEL_OK")
</pallas_src>

<mosaic_0001>
module attributes {stable_mosaic.version = 11 : i64} {
  func.func @_decoder_attn_kernel(%arg0: i32, %arg1: memref<1x8x32xf32, #tpu.memory_space<vmem>>, %arg2: memref<1x8x32xf32, #tpu.memory_space<vmem>>, %arg3: memref<4x32x8xf32, #tpu.memory_space<vmem>>, %arg4: memref<4x1x8xf32, #tpu.memory_space<vmem>>, %arg5: memref<4x32x8xf32, #tpu.memory_space<vmem>>, %arg6: memref<4x1x8xf32, #tpu.memory_space<vmem>>, %arg7: memref<4x32x8xf32, #tpu.memory_space<vmem>>, %arg8: memref<4x1x8xf32, #tpu.memory_space<vmem>>, %arg9: memref<4x8x32xf32, #tpu.memory_space<vmem>>, %arg10: memref<1x32xf32, #tpu.memory_space<vmem>>, %arg11: memref<1x8x32xf32, #tpu.memory_space<vmem>>, %arg12: memref<1x4x8x8xf32, #tpu.memory_space<vmem>>) attributes {dimension_semantics = [#tpu.dimension_semantics<parallel>], iteration_bounds = array<i64: 2>, scalar_prefetch = 0 : i64, scratch_operands = 0 : i64, tpu.core_type = #tpu.core_type<tc>, window_params = [{transform_indices = @transform_0, window_bounds = array<i64: 1, 8, 32>}, {transform_indices = @transform_1, window_bounds = array<i64: 1, 8, 32>}, {pipeline_mode = #tpu.pipeline_mode<synchronous>, transform_indices = @transform_2, window_bounds = array<i64: 4, 32, 8>}, {pipeline_mode = #tpu.pipeline_mode<synchronous>, transform_indices = @transform_3, window_bounds = array<i64: 4, 1, 8>}, {pipeline_mode = #tpu.pipeline_mode<synchronous>, transform_indices = @transform_4, window_bounds = array<i64: 4, 32, 8>}, {pipeline_mode = #tpu.pipeline_mode<synchronous>, transform_indices = @transform_5, window_bounds = array<i64: 4, 1, 8>}, {pipeline_mode = #tpu.pipeline_mode<synchronous>, transform_indices = @transform_6, window_bounds = array<i64: 4, 32, 8>}, {pipeline_mode = #tpu.pipeline_mode<synchronous>, transform_indices = @transform_7, window_bounds = array<i64: 4, 1, 8>}, {pipeline_mode = #tpu.pipeline_mode<synchronous>, transform_indices = @transform_8, window_bounds = array<i64: 4, 8, 32>}, {pipeline_mode = #tpu.pipeline_mode<synchronous>, transform_indices = @transform_9, window_bounds = array<i64: 1, 32>}, {transform_indices = @transform_10, window_bounds = array<i64: 1, 8, 32>}, {transform_indices = @transform_11, window_bounds = array<i64: 1, 4, 8, 8>}]} {
    %c0 = arith.constant 0 : index
    %c0_0 = arith.constant 0 : index
    %c0_1 = arith.constant 0 : index
    %0 = vector.load %arg2[%c0, %c0_0, %c0_1] : memref<1x8x32xf32, #tpu.memory_space<vmem>>, vector<1x8x32xf32>
    %1 = vector.shape_cast %0 : vector<1x8x32xf32> to vector<8x32xf32>
    %c0_2 = arith.constant 0 : index
    %c0_3 = arith.constant 0 : index
    %c0_4 = arith.constant 0 : index
    %2 = vector.load %arg1[%c0_2, %c0_3, %c0_4] : memref<1x8x32xf32, #tpu.memory_space<vmem>>, vector<1x8x32xf32>
    %3 = vector.shape_cast %2 : vector<1x8x32xf32> to vector<8x32xf32>
    %4 = vector.shape_cast %1 : vector<8x32xf32> to vector<1x8x32xf32>
    %5 = vector.shape_cast %4 : vector<1x8x32xf32> to vector<1x8x32xf32>
    %6 = vector.broadcast %5 : vector<1x8x32xf32> to vector<4x8x32xf32>
    %7 = vector.shape_cast %3 : vector<8x32xf32> to vector<1x8x32xf32>
    %8 = vector.shape_cast %7 : vector<1x8x32xf32> to vector<1x8x32xf32>
    %9 = vector.broadcast %8 : vector<1x8x32xf32> to vector<4x8x32xf32>
    %c0_5 = arith.constant 0 : index
    %c0_6 = arith.constant 0 : index
    %c0_7 = arith.constant 0 : index
    %10 = vector.load %arg3[%c0_5, %c0_6, %c0_7] : memref<4x32x8xf32, #tpu.memory_space<vmem>>, vector<4x32x8xf32>
    "tpu.trace_start"() <{level = 10 : i32, message = "hsd,hdk->hsk"}> : () -> ()
    %cst = arith.constant dense<0.000000e+00> : vector<4x8x8xf32>
    %11 = tpu.matmul %6, %10, %cst {dimension_numbers = #tpu.dot_dimension_numbers<[2], [1], [1], [2], [0, 0, 0, 1, 1, 2], [0], [0]>} : vector<4x8x32xf32>, vector<4x32x8xf32>, vector<4x8x8xf32> -> vector<4x8x8xf32>
    "tpu.trace_stop"() : () -> ()
    %c0_8 = arith.constant 0 : index
    %c0_9 = arith.constant 0 : index
    %c0_10 = arith.constant 0 : index
    %12 = vector.load %arg4[%c0_8, %c0_9, %c0_10] : memref<4x1x8xf32, #tpu.memory_space<vmem>>, vector<4x1x8xf32>
    %13 = vector.broadcast %12 : vector<4x1x8xf32> to vector<4x8x8xf32>
    %14 = arith.addf %11, %13 : vector<4x8x8xf32>
    %c0_11 = arith.constant 0 : index
    %c0_12 = arith.constant 0 : index
    %c0_13 = arith.constant 0 : index
    %15 = vector.load %arg5[%c0_11, %c0_12, %c0_13] : memref<4x32x8xf32, #tpu.memory_space<vmem>>, vector<4x32x8xf32>
    "tpu.trace_start"() <{level = 10 : i32, message = "hsd,hdk->hsk"}> : () -> ()
    %cst_14 = arith.constant dense<0.000000e+00> : vector<4x8x8xf32>
    %16 = tpu.matmul %6, %15, %cst_14 {dimension_numbers = #tpu.dot_dimension_numbers<[2], [1], [1], [2], [0, 0, 0, 1, 1, 2], [0], [0]>} : vector<4x8x32xf32>, vector<4x32x8xf32>, vector<4x8x8xf32> -> vector<4x8x8xf32>
    "tpu.trace_stop"() : () -> ()
    %c0_15 = arith.constant 0 : index
    %c0_16 = arith.constant 0 : index
    %c0_17 = arith.constant 0 : index
    %17 = vector.load %arg6[%c0_15, %c0_16, %c0_17] : memref<4x1x8xf32, #tpu.memory_space<vmem>>, vector<4x1x8xf32>
    %18 = vector.broadcast %17 : vector<4x1x8xf32> to vector<4x8x8xf32>
    %19 = arith.addf %16, %18 : vector<4x8x8xf32>
    %c0_18 = arith.constant 0 : index
    %c0_19 = arith.constant 0 : index
    %c0_20 = arith.constant 0 : index
    %20 = vector.load %arg7[%c0_18, %c0_19, %c0_20] : memref<4x32x8xf32, #tpu.memory_space<vmem>>, vector<4x32x8xf32>
    "tpu.trace_start"() <{level = 10 : i32, message = "hsd,hdk->hsk"}> : () -> ()
    %cst_21 = arith.constant dense<0.000000e+00> : vector<4x8x8xf32>
    %21 = tpu.matmul %9, %20, %cst_21 {dimension_numbers = #tpu.dot_dimension_numbers<[2], [1], [1], [2], [0, 0, 0, 1, 1, 2], [0], [0]>} : vector<4x8x32xf32>, vector<4x32x8xf32>, vector<4x8x8xf32> -> vector<4x8x8xf32>
    "tpu.trace_stop"() : () -> ()
    %c0_22 = arith.constant 0 : index
    %c0_23 = arith.constant 0 : index
    %c0_24 = arith.constant 0 : index
    %22 = vector.load %arg8[%c0_22, %c0_23, %c0_24] : memref<4x1x8xf32, #tpu.memory_space<vmem>>, vector<4x1x8xf32>
    %23 = vector.broadcast %22 : vector<4x1x8xf32> to vector<4x8x8xf32>
    %24 = arith.addf %21, %23 : vector<4x8x8xf32>
    %cst_25 = arith.constant 0.353553385 : f32
    %25 = vector.broadcast %cst_25 : f32 to vector<4x8x8xf32>
    %26 = arith.mulf %14, %25 : vector<4x8x8xf32>
    "tpu.trace_start"() <{level = 10 : i32, message = "hqk,hpk->hqp"}> : () -> ()
    %cst_26 = arith.constant dense<0.000000e+00> : vector<4x8x8xf32>
    %27 = tpu.matmul %26, %19, %cst_26 {dimension_numbers = #tpu.dot_dimension_numbers<[2], [2], [1], [1], [0, 0, 0, 1, 1, 1], [0], [0]>} : vector<4x8x8xf32>, vector<4x8x8xf32>, vector<4x8x8xf32> -> vector<4x8x8xf32>
    "tpu.trace_stop"() : () -> ()
    %28 = tpu.iota {dimensions = array<i32: 1>} : vector<1x8x8xi32>
    %29 = tpu.iota {dimensions = array<i32: 2>} : vector<1x8x8xi32>
    %30 = arith.cmpi sle, %29, %28 : vector<1x8x8xi32>
    %cst_27 = arith.constant -1.000000e+05 : f32
    %31 = vector.shape_cast %30 : vector<1x8x8xi1> to vector<1x8x8xi1>
    %32 = vector.broadcast %31 : vector<1x8x8xi1> to vector<4x8x8xi1>
    %33 = vector.broadcast %cst_27 : f32 to vector<4x8x8xf32>
    %34 = arith.select %32, %27, %33 : vector<4x8x8xi1>, vector<4x8x8xf32>
    %cst_28 = arith.constant dense<0xFF800000> : vector<4x8xf32>
    %35 = vector.multi_reduction <maximumf>, %34, %cst_28 [2] : vector<4x8x8xf32> to vector<4x8xf32>
    %36 = vector.shape_cast %35 : vector<4x8xf32> to vector<4x8x1xf32>
    %37 = vector.broadcast %36 : vector<4x8x1xf32> to vector<4x8x8xf32>
    %38 = arith.subf %34, %37 : vector<4x8x8xf32>
    %39 = math.exp %38 : vector<4x8x8xf32>
    %cst_29 = arith.constant dense<0.000000e+00> : vector<4x8xf32>
    %40 = vector.multi_reduction <add>, %39, %cst_29 [2] : vector<4x8x8xf32> to vector<4x8xf32>
    %41 = vector.shape_cast %40 : vector<4x8xf32> to vector<4x8x1xf32>
    %42 = tpu.reciprocal %41 : vector<4x8x1xf32> -> vector<4x8x1xf32>
    %43 = vector.broadcast %42 : vector<4x8x1xf32> to vector<4x8x8xf32>
    %44 = arith.mulf %39, %43 : vector<4x8x8xf32>
    %c0_30 = arith.constant 0 : index
    %c0_31 = arith.constant 0 : index
    %c0_32 = arith.constant 0 : index
    %c0_33 = arith.constant 0 : index
    %45 = vector.load %arg12[%c0_30, %c0_31, %c0_32, %c0_33] : memref<1x4x8x8xf32, #tpu.memory_space<vmem>>, vector<1x4x8x8xf32>
    %46 = vector.shape_cast %45 : vector<1x4x8x8xf32> to vector<4x8x8xf32>
    %47 = vector.shape_cast %44 : vector<4x8x8xf32> to vector<1x4x8x8xf32>
    tpu.vector_store %arg12[%c0_30, %c0_31, %c0_32, %c0_33], %47 {strides = array<i32>} : memref<1x4x8x8xf32, #tpu.memory_space<vmem>>, vector<1x4x8x8xf32>,
    "tpu.trace_start"() <{level = 10 : i32, message = "hqp,hpk->hqk"}> : () -> ()
    %cst_34 = arith.constant dense<0.000000e+00> : vector<4x8x8xf32>
    %48 = tpu.matmul %44, %24, %cst_34 {dimension_numbers = #tpu.dot_dimension_numbers<[2], [1], [1], [2], [0, 0, 0, 1, 1, 2], [0], [0]>} : vector<4x8x8xf32>, vector<4x8x8xf32>, vector<4x8x8xf32> -> vector<4x8x8xf32>
    "tpu.trace_stop"() : () -> ()
    %c0_35 = arith.constant 0 : index
    %c0_36 = arith.constant 0 : index
    %c0_37 = arith.constant 0 : index
    %49 = vector.load %arg9[%c0_35, %c0_36, %c0_37] : memref<4x8x32xf32, #tpu.memory_space<vmem>>, vector<4x8x32xf32>
    "tpu.trace_start"() <{level = 10 : i32, message = "hqk,hkd->hqd"}> : () -> ()
    %cst_38 = arith.constant dense<0.000000e+00> : vector<4x8x32xf32>
    %50 = tpu.matmul %48, %49, %cst_38 {dimension_numbers = #tpu.dot_dimension_numbers<[2], [1], [1], [2], [0, 0, 0, 1, 1, 2], [0], [0]>} : vector<4x8x8xf32>, vector<4x8x32xf32>, vector<4x8x32xf32> -> vector<4x8x32xf32>
    "tpu.trace_stop"() : () -> ()
    %cst_39 = arith.constant dense<0.000000e+00> : vector<8x32xf32>
    %51 = vector.multi_reduction <add>, %50, %cst_39 [0] : vector<4x8x32xf32> to vector<8x32xf32>
    %c0_40 = arith.constant 0 : index
    %c0_41 = arith.constant 0 : index
    %52 = vector.load %arg10[%c0_40, %c0_41] : memref<1x32xf32, #tpu.memory_space<vmem>>, vector<1x32xf32>
    %53 = vector.broadcast %52 : vector<1x32xf32> to vector<8x32xf32>
    %54 = arith.addf %51, %53 : vector<8x32xf32>
    %c0_42 = arith.constant 0 : index
    %c0_43 = arith.constant 0 : index
    %c0_44 = arith.constant 0 : index
    %55 = vector.load %arg11[%c0_42, %c0_43, %c0_44] : memref<1x8x32xf32, #tpu.memory_space<vmem>>, vector<1x8x32xf32>
    %56 = vector.shape_cast %55 : vector<1x8x32xf32> to vector<8x32xf32>
    %57 = vector.shape_cast %54 : vector<8x32xf32> to vector<1x8x32xf32>
    tpu.vector_store %arg11[%c0_42, %c0_43, %c0_44], %57 {strides = array<i32>} : memref<1x8x32xf32, #tpu.memory_space<vmem>>, vector<1x8x32xf32>,
    return
  }
  func.func @transform_0(%arg0: i32) -> (i32, i32, i32) {
    %c0_i32 = arith.constant 0 : i32
    %c0_i32_0 = arith.constant 0 : i32
    %c0_i32_1 = arith.constant 0 : i32
    return %arg0, %c0_i32, %c0_i32_0 : i32, i32, i32
  }
  func.func @transform_1(%arg0: i32) -> (i32, i32, i32) {
    %c0_i32 = arith.constant 0 : i32
    %c0_i32_0 = arith.constant 0 : i32
    %c0_i32_1 = arith.constant 0 : i32
    return %arg0, %c0_i32, %c0_i32_0 : i32, i32, i32
  }
  func.func @transform_2(%arg0: i32) -> (i32, i32, i32) {
    %c0_i32 = arith.constant 0 : i32
    %c0_i32_0 = arith.constant 0 : i32
    %c0_i32_1 = arith.constant 0 : i32
    %c0_i32_2 = arith.constant 0 : i32
    return %c0_i32, %c0_i32_0, %c0_i32_1 : i32, i32, i32
  }
  func.func @transform_3(%arg0: i32) -> (i32, i32, i32) {
    %c0_i32 = arith.constant 0 : i32
    %c0_i32_0 = arith.constant 0 : i32
    %c0_i32_1 = arith.constant 0 : i32
    %c0_i32_2 = arith.constant 0 : i32
    return %c0_i32, %c0_i32_0, %c0_i32_1 : i32, i32, i32
  }
  func.func @transform_4(%arg0: i32) -> (i32, i32, i32) {
    %c0_i32 = arith.constant 0 : i32
    %c0_i32_0 = arith.constant 0 : i32
    %c0_i32_1 = arith.constant 0 : i32
    %c0_i32_2 = arith.constant 0 : i32
    return %c0_i32, %c0_i32_0, %c0_i32_1 : i32, i32, i32
  }
  func.func @transform_5(%arg0: i32) -> (i32, i32, i32) {
    %c0_i32 = arith.constant 0 : i32
    %c0_i32_0 = arith.constant 0 : i32
    %c0_i32_1 = arith.constant 0 : i32
    %c0_i32_2 = arith.constant 0 : i32
    return %c0_i32, %c0_i32_0, %c0_i32_1 : i32, i32, i32
  }
  func.func @transform_6(%arg0: i32) -> (i32, i32, i32) {
    %c0_i32 = arith.constant 0 : i32
    %c0_i32_0 = arith.constant 0 : i32
    %c0_i32_1 = arith.constant 0 : i32
    %c0_i32_2 = arith.constant 0 : i32
    return %c0_i32, %c0_i32_0, %c0_i32_1 : i32, i32, i32
  }
  func.func @transform_7(%arg0: i32) -> (i32, i32, i32) {
    %c0_i32 = arith.constant 0 : i32
    %c0_i32_0 = arith.constant 0 : i32
    %c0_i32_1 = arith.constant 0 : i32
    %c0_i32_2 = arith.constant 0 : i32
    return %c0_i32, %c0_i32_0, %c0_i32_1 : i32, i32, i32
  }
  func.func @transform_8(%arg0: i32) -> (i32, i32, i32) {
    %c0_i32 = arith.constant 0 : i32
    %c0_i32_0 = arith.constant 0 : i32
    %c0_i32_1 = arith.constant 0 : i32
    %c0_i32_2 = arith.constant 0 : i32
    return %c0_i32, %c0_i32_0, %c0_i32_1 : i32, i32, i32
  }
  func.func @transform_9(%arg0: i32) -> (i32, i32) {
    %c0_i32 = arith.constant 0 : i32
    %c0_i32_0 = arith.constant 0 : i32
    %c0_i32_1 = arith.constant 0 : i32
    return %c0_i32, %c0_i32_0 : i32, i32
  }
  func.func @transform_10(%arg0: i32) -> (i32, i32, i32) {
    %c0_i32 = arith.constant 0 : i32
    %c0_i32_0 = arith.constant 0 : i32
    %c0_i32_1 = arith.constant 0 : i32
    return %arg0, %c0_i32, %c0_i32_0 : i32, i32, i32
  }
  func.func @transform_11(%arg0: i32) -> (i32, i32, i32, i32) {
    %c0_i32 = arith.constant 0 : i32
    %c0_i32_0 = arith.constant 0 : i32
    %c0_i32_1 = arith.constant 0 : i32
    %c0_i32_2 = arith.constant 0 : i32
    return %arg0, %c0_i32, %c0_i32_0, %c0_i32_1 : i32, i32, i32, i32
  }
}

</mosaic_0001>

<llo_original>
// kernel: decoder_attention_forward.1
$region0: #{decoder_attention_forward.1}
  #allocation0 [shape = 'u32[]', space=smem, size = 0x4, offset = 0x4, fixed_abs, tag = 'smem constant byte address 0x4 - core index']
  #allocation1 [shape = 'u32[72,128]{1,0:T(1,128)}', space=vmem, size = 0x9000, scoped, tag = 'internal scratch']
  %s0 = inlined_call_operand.vmem [shape: f32[2,8,32], index: 0, kind: input, shape index: {}]
  %s1 = inlined_call_operand.vmem [shape: f32[2,8,32], index: 1, kind: input, shape index: {}]
  %s2 = inlined_call_operand.vmem [shape: f32[4,32,8], index: 2, kind: input, shape index: {}]
  %s3 = inlined_call_operand.vmem [shape: f32[4,1,8], index: 3, kind: input, shape index: {}]
  %s4 = inlined_call_operand.vmem [shape: f32[4,32,8], index: 4, kind: input, shape index: {}]
  %s5 = inlined_call_operand.vmem [shape: f32[4,1,8], index: 5, kind: input, shape index: {}]
  %s6 = inlined_call_operand.vmem [shape: f32[4,32,8], index: 6, kind: input, shape index: {}]
  %s7 = inlined_call_operand.vmem [shape: f32[4,1,8], index: 7, kind: input, shape index: {}]
  %s8 = inlined_call_operand.vmem [shape: f32[4,8,32], index: 8, kind: input, shape index: {}]
  %s9 = inlined_call_operand.vmem [shape: f32[1,32], index: 9, kind: input, shape index: {}]
  %s10 = inlined_call_operand.hbm [shape: f32[2,8,32], index: 10, kind: output, shape index: {0}]
  %s11 = inlined_call_operand.hbm [shape: f32[2,4,8,8], index: 11, kind: output, shape index: {1}]
  %12 = xla_tuple %s10, %s11
  %s13 = sld [smem:[#allocation0]]
  $region81: #{decoder_attention_forward.1} parent=0
    _
  %s15 = ssub.s32 1, %s13
  %s16 = scalar_select 0, %s15, %s13
  $region1: #{decoder_attention_forward.1} parent=0
    #allocation2 [shape = 'u8[8192]{0}', space=vmem, size = 0x2000, scoped, tag = 'output window, operand 0']
    #allocation3 [shape = 's32[2]{0}', space=sflag, size = 0x8, scoped, tag = 'scoped memory for decoder_attention_forward.1']
    #allocation4 [shape = 'u8[32768]{0}', space=vmem, size = 0x8000, scoped, tag = 'output window, operand 1']
    #allocation5 [shape = 's32[2]{0}', space=sflag, size = 0x8, scoped, tag = 'scoped memory for decoder_attention_forward.1']
    %17 = vsyncpa [#allocation3], 0
    %s18 = scalar_lea.sflag [#allocation3], 1
    %19 = vsyncpa %s18, 0
    %20 = vsyncpa [#allocation5], 0
    %s21 = scalar_lea.sflag [#allocation5], 1
    %22 = vsyncpa %s21, 0
    loop: start=0, step=1, limit=4
    $region2: #{decoder_attention_forward.1} parent=1 // loop_pre_header
      _
    $region3: #{decoder_attention_forward.1} parent=1 // loop_header
      %s24 = sphi 0, %s28
      %p25 = scmp.ge.s32.totalorder %s24, 4
      %s34 = sphi 0, %s36
      %s37 = sphi 0, %s34
      %s38 = sphi 0, %s37
      %s54 = sphi 0, %s38
      %s60 = sphi 0, %s62
      %s63 = sphi 0, %s60
      %s64 = sphi 0, %s63
      %s80 = sphi 0, %s64
      %s84 = sphi 0, %s84
      %s86 = sphi 0, %s84
      %s87 = sphi 0, %s86
      %s101 = sphi 0, %s87
      %s105 = sphi 0, %s105
      %s107 = sphi 0, %s105
      %s108 = sphi 0, %s107
      %s122 = sphi 0, %s108
      %s126 = sphi 0, %s126
      %s128 = sphi 0, %s126
      %s129 = sphi 0, %s128
      %s143 = sphi 0, %s129
      %s147 = sphi 0, %s147
      %s149 = sphi 0, %s147
      %s150 = sphi 0, %s149
      %s164 = sphi 0, %s150
      %s168 = sphi 0, %s168
      %s170 = sphi 0, %s168
      %s171 = sphi 0, %s170
      %s185 = sphi 0, %s171
      %s189 = sphi 0, %s189
      %s191 = sphi 0, %s189
      %s192 = sphi 0, %s191
      %s206 = sphi 0, %s192
      %s210 = sphi 0, %s210
      %s212 = sphi 0, %s210
      %s213 = sphi 0, %s212
      %s227 = sphi 0, %s213
      %s231 = sphi 0, %s231
      %s233 = sphi 0, %s231
      %s234 = sphi 0, %s233
      %s248 = sphi 0, %s234
      %s254 = sphi 0, %s256
      %s257 = sphi 0, %s254
      %s258 = sphi 0, %s257
      %s274 = sphi 0, %s258
      %s280 = sphi 0, %s282
      %s283 = sphi 0, %s280
      %s284 = sphi 0, %s283
      %s300 = sphi 0, %s284
    $region4: #{decoder_attention_forward.1} parent=1 // loop_header_branch
      %27 = sbr.rel (%p25) target = $region8
    $region5: #{decoder_attention_forward.1} parent=1 // loop_body
      %s29 = ssub.s32 %s24, 1
      %s30 = ssub.s32 %s24, 2
      %s31 = sadd.s32 %s24, 1
      %s32 = ssub.s32 %s24, %s31
      %p33 = scmp.eq.s32.totalorder %s32, 0
      %s35 = sadd.s32 %s34, 1
      %s36 = scalar_select %p33, %s34, %s35
      %p39 = pneg %p33
      %p40 = scmp.eq.s32.totalorder %s24, 1
      %p41 = por %p39, %p40
      %p42 = scmp.ne.s32.totalorder %s34, %s37
      %p43 = scmp.eq.s32.totalorder %s24, 0
      %p44 = por %p42, %p43
      %p45 = scmp.ne.s32.totalorder %s34, %s37
      %p46 = scmp.eq.s32.totalorder %s29, 1
      %p47 = por %p45, %p46
      %p48 = scmp.ne.s32.totalorder %s37, %s38
      %p49 = scmp.eq.s32.totalorder %s29, 0
      %p50 = por %p48, %p49
      %p51 = scmp.ne.s32.totalorder %s37, %s38
      %p52 = scmp.eq.s32.totalorder %s30, 1
      %p53 = por %p51, %p52
      %p55 = scmp.ne.s32.totalorder %s38, %s54
      %p56 = scmp.eq.s32.totalorder %s30, 0
      %p57 = por %p55, %p56
      %s58 = ssub.s32 %s24, %s31
      %p59 = scmp.eq.s32.totalorder %s58, 0
      %s61 = sadd.s32 %s60, 1
      %s62 = scalar_select %p59, %s60, %s61
      %p65 = pneg %p59
      %p66 = scmp.eq.s32.totalorder %s24, 1
      %p67 = por %p65, %p66
      %p68 = scmp.ne.s32.totalorder %s60, %s63
      %p69 = scmp.eq.s32.totalorder %s24, 0
      %p70 = por %p68, %p69
      %p71 = scmp.ne.s32.totalorder %s60, %s63
      %p72 = scmp.eq.s32.totalorder %s29, 1
      %p73 = por %p71, %p72
      %p74 = scmp.ne.s32.totalorder %s63, %s64
      %p75 = scmp.eq.s32.totalorder %s29, 0
      %p76 = por %p74, %p75
      %p77 = scmp.ne.s32.totalorder %s63, %s64
      %p78 = scmp.eq.s32.totalorder %s30, 1
      %p79 = por %p77, %p78
      %p81 = scmp.ne.s32.totalorder %s64, %s80
      %p82 = scmp.eq.s32.totalorder %s30, 0
      %p83 = por %p81, %p82
      %s85 = sadd.s32 %s84, 1
      %p88 = scmp.eq.s32.totalorder %s24, 1
      %p89 = scmp.ne.s32.totalorder %s84, %s86
      %p90 = scmp.eq.s32.totalorder %s24, 0
      %p91 = por %p89, %p90
      %p92 = scmp.ne.s32.totalorder %s84, %s86
      %p93 = scmp.eq.s32.totalorder %s29, 1
      %p94 = por %p92, %p93
      %p95 = scmp.ne.s32.totalorder %s86, %s87
      %p96 = scmp.eq.s32.totalorder %s29, 0
      %p97 = por %p95, %p96
      %p98 = scmp.ne.s32.totalorder %s86, %s87
      %p99 = scmp.eq.s32.totalorder %s30, 1
      %p100 = por %p98, %p99
      %p102 = scmp.ne.s32.totalorder %s87, %s101
      %p103 = scmp.eq.s32.totalorder %s30, 0
      %p104 = por %p102, %p103
      %s106 = sadd.s32 %s105, 1
      %p109 = scmp.eq.s32.totalorder %s24, 1
      %p110 = scmp.ne.s32.totalorder %s105, %s107
      %p111 = scmp.eq.s32.totalorder %s24, 0
      %p112 = por %p110, %p111
      %p113 = scmp.ne.s32.totalorder %s105, %s107
      %p114 = scmp.eq.s32.totalorder %s29, 1
      %p115 = por %p113, %p114
      %p116 = scmp.ne.s32.totalorder %s107, %s108
      %p117 = scmp.eq.s32.totalorder %s29, 0
      %p118 = por %p116, %p117
      %p119 = scmp.ne.s32.totalorder %s107, %s108
      %p120 = scmp.eq.s32.totalorder %s30, 1
      %p121 = por %p119, %p120
      %p123 = scmp.ne.s32.totalorder %s108, %s122
      %p124 = scmp.eq.s32.totalorder %s30, 0
      %p125 = por %p123, %p124
      %s127 = sadd.s32 %s126, 1
      %p130 = scmp.eq.s32.totalorder %s24, 1
      %p131 = scmp.ne.s32.totalorder %s126, %s128
      %p132 = scmp.eq.s32.totalorder %s24, 0
      %p133 = por %p131, %p132
      %p134 = scmp.ne.s32.totalorder %s126, %s128
      %p135 = scmp.eq.s32.totalorder %s29, 1
      %p136 = por %p134, %p135
      %p137 = scmp.ne.s32.totalorder %s128, %s129
      %p138 = scmp.eq.s32.totalorder %s29, 0
      %p139 = por %p137, %p138
      %p140 = scmp.ne.s32.totalorder %s128, %s129
      %p141 = scmp.eq.s32.totalorder %s30, 1
      %p142 = por %p140, %p141
      %p144 = scmp.ne.s32.totalorder %s129, %s143
      %p145 = scmp.eq.s32.totalorder %s30, 0
      %p146 = por %p144, %p145
      %s148 = sadd.s32 %s147, 1
      %p151 = scmp.eq.s32.totalorder %s24, 1
      %p152 = scmp.ne.s32.totalorder %s147, %s149
      %p153 = scmp.eq.s32.totalorder %s24, 0
      %p154 = por %p152, %p153
      %p155 = scmp.ne.s32.totalorder %s147, %s149
      %p156 = scmp.eq.s32.totalorder %s29, 1
      %p157 = por %p155, %p156
      %p158 = scmp.ne.s32.totalorder %s149, %s150
      %p159 = scmp.eq.s32.totalorder %s29, 0
      %p160 = por %p158, %p159
      %p161 = scmp.ne.s32.totalorder %s149, %s150
      %p162 = scmp.eq.s32.totalorder %s30, 1
      %p163 = por %p161, %p162
      %p165 = scmp.ne.s32.totalorder %s150, %s164
      %p166 = scmp.eq.s32.totalorder %s30, 0
      %p167 = por %p165, %p166
      %s169 = sadd.s32 %s168, 1
      %p172 = scmp.eq.s32.totalorder %s24, 1
      %p173 = scmp.ne.s32.totalorder %s168, %s170
      %p174 = scmp.eq.s32.totalorder %s24, 0
      %p175 = por %p173, %p174
      %p176 = scmp.ne.s32.totalorder %s168, %s170
      %p177 = scmp.eq.s32.totalorder %s29, 1
      %p178 = por %p176, %p177
      %p179 = scmp.ne.s32.totalorder %s170, %s171
      %p180 = scmp.eq.s32.totalorder %s29, 0
      %p181 = por %p179, %p180
      %p182 = scmp.ne.s32.totalorder %s170, %s171
      %p183 = scmp.eq.s32.totalorder %s30, 1
      %p184 = por %p182, %p183
      %p186 = scmp.ne.s32.totalorder %s171, %s185
      %p187 = scmp.eq.s32.totalorder %s30, 0
      %p188 = por %p186, %p187
      %s190 = sadd.s32 %s189, 1
      %p193 = scmp.eq.s32.totalorder %s24, 1
      %p194 = scmp.ne.s32.totalorder %s189, %s191
      %p195 = scmp.eq.s32.totalorder %s24, 0
      %p196 = por %p194, %p195
      %p197 = scmp.ne.s32.totalorder %s189, %s191
      %p198 = scmp.eq.s32.totalorder %s29, 1
      %p199 = por %p197, %p198
      %p200 = scmp.ne.s32.totalorder %s191, %s192
      %p201 = scmp.eq.s32.totalorder %s29, 0
      %p202 = por %p200, %p201
      %p203 = scmp.ne.s32.totalorder %s191, %s192
      %p204 = scmp.eq.s32.totalorder %s30, 1
      %p205 = por %p203, %p204
      %p207 = scmp.ne.s32.totalorder %s192, %s206
      %p208 = scmp.eq.s32.totalorder %s30, 0
      %p209 = por %p207, %p208
      %s211 = sadd.s32 %s210, 1
      %p214 = scmp.eq.s32.totalorder %s24, 1
      %p215 = scmp.ne.s32.totalorder %s210, %s212
      %p216 = scmp.eq.s32.totalorder %s24, 0
      %p217 = por %p215, %p216
      %p218 = scmp.ne.s32.totalorder %s210, %s212
      %p219 = scmp.eq.s32.totalorder %s29, 1
      %p220 = por %p218, %p219
      %p221 = scmp.ne.s32.totalorder %s212, %s213
      %p222 = scmp.eq.s32.totalorder %s29, 0
      %p223 = por %p221, %p222
      %p224 = scmp.ne.s32.totalorder %s212, %s213
      %p225 = scmp.eq.s32.totalorder %s30, 1
      %p226 = por %p224, %p225
      %p228 = scmp.ne.s32.totalorder %s213, %s227
      %p229 = scmp.eq.s32.totalorder %s30, 0
      %p230 = por %p228, %p229
      %s232 = sadd.s32 %s231, 1
      %p235 = scmp.eq.s32.totalorder %s24, 1
      %p236 = scmp.ne.s32.totalorder %s231, %s233
      %p237 = scmp.eq.s32.totalorder %s24, 0
      %p238 = por %p236, %p237
      %p239 = scmp.ne.s32.totalorder %s231, %s233
      %p240 = scmp.eq.s32.totalorder %s29, 1
      %p241 = por %p239, %p240
      %p242 = scmp.ne.s32.totalorder %s233, %s234
      %p243 = scmp.eq.s32.totalorder %s29, 0
      %p244 = por %p242, %p243
      %p245 = scmp.ne.s32.totalorder %s233, %s234
      %p246 = scmp.eq.s32.totalorder %s30, 1
      %p247 = por %p245, %p246
      %p249 = scmp.ne.s32.totalorder %s234, %s248
      %p250 = scmp.eq.s32.totalorder %s30, 0
      %p251 = por %p249, %p250
      %s252 = ssub.s32 %s24, %s31
      %p253 = scmp.eq.s32.totalorder %s252, 0
      %s255 = sadd.s32 %s254, 1
      %s256 = scalar_select %p253, %s254, %s255
      %p259 = pneg %p253
      %p260 = scmp.eq.s32.totalorder %s24, 1
      %p261 = por %p259, %p260
      %p262 = scmp.ne.s32.totalorder %s254, %s257
      %p263 = scmp.eq.s32.totalorder %s24, 0
      %p264 = por %p262, %p263
      %p265 = scmp.ne.s32.totalorder %s254, %s257
      %p266 = scmp.eq.s32.totalorder %s29, 1
      %p267 = por %p265, %p266
      %p268 = scmp.ne.s32.totalorder %s257, %s258
      %p269 = scmp.eq.s32.totalorder %s29, 0
      %p270 = por %p268, %p269
      %p271 = scmp.ne.s32.totalorder %s257, %s258
      %p272 = scmp.eq.s32.totalorder %s30, 1
      %p273 = por %p271, %p272
      %p275 = scmp.ne.s32.totalorder %s258, %s274
      %p276 = scmp.eq.s32.totalorder %s30, 0
      %p277 = por %p275, %p276
      %s278 = ssub.s32 %s24, %s31
      %p279 = scmp.eq.s32.totalorder %s278, 0
      %s281 = sadd.s32 %s280, 1
      %s282 = scalar_select %p279, %s280, %s281
      %p285 = pneg %p279
      %p286 = scmp.eq.s32.totalorder %s24, 1
      %p287 = por %p285, %p286
      %p288 = scmp.ne.s32.totalorder %s280, %s283
      %p289 = scmp.eq.s32.totalorder %s24, 0
      %p290 = por %p288, %p289
      %p291 = scmp.ne.s32.totalorder %s280, %s283
      %p292 = scmp.eq.s32.totalorder %s29, 1
      %p293 = por %p291, %p292
      %p294 = scmp.ne.s32.totalorder %s283, %s284
      %p295 = scmp.eq.s32.totalorder %s29, 0
      %p296 = por %p294, %p295
      %p297 = scmp.ne.s32.totalorder %s283, %s284
      %p298 = scmp.eq.s32.totalorder %s30, 1
      %p299 = por %p297, %p298
      %p301 = scmp.ne.s32.totalorder %s284, %s300
      %p302 = scmp.eq.s32.totalorder %s30, 0
      %p303 = por %p301, %p302
      %p304 = scmp.le.s32.totalorder 1, %s24
      %p305 = scmp.lt.s32.totalorder %s24, 3
      %p306 = pnand %p304, %p305
      %p307 = pneg %p306
      // Predicated region
      $region9: #{decoder_attention_forward.1} parent=5 // pred_check
        _
      $region10: #{decoder_attention_forward.1} parent=5 // pred_check_branch
        %309 = sbr.rel (%p306) target = $region12
      $region11: #{decoder_attention_forward.1} parent=5 // pred_region
        %s310 = ssub.s32 %s24, 1
        // Predicated region
        $region13: #{decoder_attention_forward.1} parent=11 // pred_check
          %p311 = pneg %p97
        $region14: #{decoder_attention_forward.1} parent=11 // pred_check_branch
          %313 = sbr.rel (%p311) target = $region16
        $region15: #{decoder_attention_forward.1} parent=11 // pred_region
          _
        $region16: #{decoder_attention_forward.1} parent=11 // pred_fallthru
          _
        // Predicated region
        $region17: #{decoder_attention_forward.1} parent=11 // pred_check
          %p314 = pneg %p118
        $region18: #{decoder_attention_forward.1} parent=11 // pred_check_branch
          %316 = sbr.rel (%p314) target = $region20
        $region19: #{decoder_attention_forward.1} parent=11 // pred_region
          _
        $region20: #{decoder_attention_forward.1} parent=11 // pred_fallthru
          _
        // Predicated region
        $region21: #{decoder_attention_forward.1} parent=11 // pred_check
          %p317 = pneg %p139
        $region22: #{decoder_attention_forward.1} parent=11 // pred_check_branch
          %319 = sbr.rel (%p317) target = $region24
        $region23: #{decoder_attention_forward.1} parent=11 // pred_region
          _
        $region24: #{decoder_attention_forward.1} parent=11 // pred_fallthru
          _
        // Predicated region
        $region25: #{decoder_attention_forward.1} parent=11 // pred_check
          %p320 = pneg %p160
        $region26: #{decoder_attention_forward.1} parent=11 // pred_check_branch
          %322 = sbr.rel (%p320) target = $region28
        $region27: #{decoder_attention_forward.1} parent=11 // pred_region
          _
        $region28: #{decoder_attention_forward.1} parent=11 // pred_fallthru
          _
        // Predicated region
        $region29: #{decoder_attention_forward.1} parent=11 // pred_check
          %p323 = pneg %p181
        $region30: #{decoder_attention_forward.1} parent=11 // pred_check_branch
          %325 = sbr.rel (%p323) target = $region32
        $region31: #{decoder_attention_forward.1} parent=11 // pred_region
          _
        $region32: #{decoder_attention_forward.1} parent=11 // pred_fallthru
          _
        // Predicated region
        $region33: #{decoder_attention_forward.1} parent=11 // pred_check
          %p326 = pneg %p202
        $region34: #{decoder_attention_forward.1} parent=11 // pred_check_branch
          %328 = sbr.rel (%p326) target = $region36
        $region35: #{decoder_attention_forward.1} parent=11 // pred_region
          _
        $region36: #{decoder_attention_forward.1} parent=11 // pred_fallthru
          _
        // Predicated region
        $region37: #{decoder_attention_forward.1} parent=11 // pred_check
          %p329 = pneg %p223
        $region38: #{decoder_attention_forward.1} parent=11 // pred_check_branch
          %331 = sbr.rel (%p329) target = $region40
        $region39: #{decoder_attention_forward.1} parent=11 // pred_region
          _
        $region40: #{decoder_attention_forward.1} parent=11 // pred_fallthru
          _
        // Predicated region
        $region41: #{decoder_attention_forward.1} parent=11 // pred_check
          %p332 = pneg %p244
        $region42: #{decoder_attention_forward.1} parent=11 // pred_check_branch
          %334 = sbr.rel (%p332) target = $region44
        $region43: #{decoder_attention_forward.1} parent=11 // pred_region
          _
        $region44: #{decoder_attention_forward.1} parent=11 // pred_fallthru
          _
      $region12: #{decoder_attention_forward.1} parent=5 // pred_fallthru
        _
      %p335 = scmp.lt.s32.totalorder %s24, 2
      // Predicated region
      $region45: #{decoder_attention_forward.1} parent=5 // pred_check
        %p336 = pneg %p335
      $region46: #{decoder_attention_forward.1} parent=5 // pred_check_branch
        %338 = sbr.rel (%p336) target = $region48
      $region47: #{decoder_attention_forward.1} parent=5 // pred_region
        // Predicated region
        $region49: #{decoder_attention_forward.1} parent=47 // pred_check
          %p339 = pneg %p44
        $region50: #{decoder_attention_forward.1} parent=47 // pred_check_branch
          %341 = sbr.rel (%p339) target = $region52
        $region51: #{decoder_attention_forward.1} parent=47 // pred_region
          %p342 = scmp.lt.s32.totalorder %s24, 1
          %s343 = scalar_select %p342, %s24, 1
          %s344 = smul.addr %s343, 8
          %s345 = scalar_lea.vmem %s0, %s344
        $region52: #{decoder_attention_forward.1} parent=47 // pred_fallthru
          _
        // Predicated region
        $region53: #{decoder_attention_forward.1} parent=47 // pred_check
          %p346 = pneg %p70
        $region54: #{decoder_attention_forward.1} parent=47 // pred_check_branch
          %348 = sbr.rel (%p346) target = $region56
        $region55: #{decoder_attention_forward.1} parent=47 // pred_region
          %p349 = scmp.lt.s32.totalorder %s24, 1
          %s350 = scalar_select %p349, %s24, 1
          %s351 = smul.addr %s350, 8
          %s352 = scalar_lea.vmem %s1, %s351
        $region56: #{decoder_attention_forward.1} parent=47 // pred_fallthru
          _
      $region48: #{decoder_attention_forward.1} parent=5 // pred_fallthru
        _
      %p353 = scmp.le.s32.totalorder 1, %s24
      %p354 = scmp.lt.s32.totalorder %s24, 3
      %p355 = pnand %p353, %p354
      %p356 = pneg %p355
      // Predicated region
      $region57: #{decoder_attention_forward.1} parent=5 // pred_check
        _
      $region58: #{decoder_attention_forward.1} parent=5 // pred_check_branch
        %358 = sbr.rel (%p355) target = $region60
      $region59: #{decoder_attention_forward.1} parent=5 // pred_region
        %s359 = ssub.s32 %s24, 1
        %p360 = scmp.lt.s32.totalorder %s29, 1
        %s361 = scalar_select %p360, %s29, 1
        %s362 = smul.addr %s361, 8
        %s363 = scalar_lea.vmem %s0, %s362
        %p364 = pneg %p50
        %p365 = pneg %p47
        %p366 = scmp.lt.s32.totalorder %s29, 1
        %s367 = scalar_select %p366, %s29, 1
        %s368 = smul.addr %s367, 8
        %s369 = scalar_lea.vmem %s1, %s368
        %p370 = pneg %p76
        %p371 = pneg %p73
        %p372 = pneg %p97
        %p373 = pneg %p94
        %p374 = pneg %p118
        %p375 = pneg %p115
        %p376 = pneg %p139
        %p377 = pneg %p136
        %p378 = pneg %p160
        %p379 = pneg %p157
        %p380 = pneg %p181
        %p381 = pneg %p178
        %p382 = pneg %p202
        %p383 = pneg %p199
        %p384 = pneg %p223
        %p385 = pneg %p220
        %p386 = pneg %p244
        %p387 = pneg %p241
        %p388 = pneg %p270
        %p389 = pneg %p267
        %s390 = sand.u32 %s257, 1
        %s391 = scalar_lea.sflag [#allocation3], %s390
        %s392 = sand.u32 %s257, 1
        %s393 = smul.addr %s392, 8
        %s394 = scalar_lea.vmem [#allocation2], %s393
        %p395 = pneg %p296
        %p396 = pneg %p293
        %s397 = sand.u32 %s283, 1
        %s398 = scalar_lea.sflag [#allocation5], %s397
        %s399 = sand.u32 %s283, 1
        %s400 = smul.addr %s399, 32
        %s401 = scalar_lea.vmem [#allocation4], %s400
        %p402 = scmp.lt.s32.totalorder %s29, 1
        %s403 = scalar_select %p402, %s29, 1
        %s404 = smul.addr %s403, 8
        %s405 = scalar_lea.vmem %s0, %s404
        %p406 = scmp.lt.s32.totalorder %s29, 1
        %s407 = scalar_select %p406, %s29, 1
        %s408 = smul.addr %s407, 8
        %s409 = scalar_lea.vmem %s1, %s408
        %v410 = vld [vmem:[%s409] sm:$0xff]
        %v411 = vld [vmem:[%s405] sm:$0xff]
        %v412 = vld [vmem:[%s2] sm:$0xff]
        %v413 = vld [vmem:[%s2 + $0x8] sm:$0xff]
        %v414 = vld [vmem:[%s2 + $0x10] sm:$0xff]
        %v415 = vld [vmem:[%s2 + $0x18] sm:$0xff]
        %v416 = vld [vmem:[%s2 + $0x20] sm:$0xff]
        %v417 = vld [vmem:[%s2 + $0x28] sm:$0xff]
        %v418 = vld [vmem:[%s2 + $0x30] sm:$0xff]
        %v419 = vld [vmem:[%s2 + $0x38] sm:$0xff]
        %v420 = vld [vmem:[%s2 + $0x40] sm:$0xff]
        %v421 = vld [vmem:[%s2 + $0x48] sm:$0xff]
        %v422 = vld [vmem:[%s2 + $0x50] sm:$0xff]
        %v423 = vld [vmem:[%s2 + $0x58] sm:$0xff]
        %v424 = vld [vmem:[%s2 + $0x60] sm:$0xff]
        %v425 = vld [vmem:[%s2 + $0x68] sm:$0xff]
        %v426 = vld [vmem:[%s2 + $0x70] sm:$0xff]
        %v427 = vld [vmem:[%s2 + $0x78] sm:$0xff]
        %v428 = vld [vmem:[%s3] sm:$0x1]
        %v429 = vld [vmem:[%s3 + $0x1] sm:$0x1]
        %v430 = vld [vmem:[%s3 + $0x2] sm:$0x1]
        %v431 = vld [vmem:[%s3 + $0x3] sm:$0x1]
        %v436 = vperm.slane %v428, 0
        %v437 = vperm.slane %v429, 0
        %v438 = vperm.slane %v430, 0
        %v439 = vperm.slane %v431, 0
        %vm444 = vcmask 261120
        %v446 = vsel %vm444, %v410, 0
        %448 = vmatpush.msra.mxu0 0.0
        %449 = vmatpush.msra.mxu0 0.0
        %450 = vmatpush.msra.mxu0 0.0
        %451 = vmatpush.msra.mxu0 0.0
        %452 = vmatpush.msra.mxu0 0.0
        %453 = vmatpush.msra.mxu0 0.0
        %454 = vmatpush.msra.mxu0 0.0
        %455 = vmatpush.msra.mxu0 0.0
        %456 = vmatpush.msra.mxu0 0.0
        %457 = vmatpush.msra.mxu0 0.0
        %458 = vmatpush.msra.mxu0 0.0
        %459 = vmatpush.msra.mxu0 0.0
        %460 = vmatpush.msra.mxu0 %v415
        %461 = vmatpush.msra.mxu0 %v414
        %462 = vmatpush.msra.mxu0 %v413
        %463 = vmatpush.msra.mxu0 %v412
        %464 = vmatmul.f32.gmra.mxu0 %v446
        %v465 = vpop.f32.mrf.mxu0
        %v466 = vadd.f32 %v436, %v465
        %467 = vdwg.mxu0
        %468 = vmatpush.msra.mxu0 0.0
        %469 = vmatpush.msra.mxu0 0.0
        %470 = vmatpush.msra.mxu0 0.0
        %471 = vmatpush.msra.mxu0 0.0
        %472 = vmatpush.msra.mxu0 0.0
        %473 = vmatpush.msra.mxu0 0.0
        %474 = vmatpush.msra.mxu0 0.0
        %475 = vmatpush.msra.mxu0 0.0
        %476 = vmatpush.msra.mxu0 0.0
        %477 = vmatpush.msra.mxu0 0.0
        %478 = vmatpush.msra.mxu0 0.0
        %479 = vmatpush.msra.mxu0 0.0
        %480 = vmatpush.msra.mxu0 %v419
        %481 = vmatpush.msra.mxu0 %v418
        %482 = vmatpush.msra.mxu0 %v417
        %483 = vmatpush.msra.mxu0 %v416
        %484 = vmatmul.f32.gmra.mxu0 %v446
        %v485 = vpop.f32.mrf.mxu0
        %v486 = vadd.f32 %v437, %v485
        %487 = vdwg.mxu0
        %488 = vmatpush.msra.mxu0 0.0
        %489 = vmatpush.msra.mxu0 0.0
        %490 = vmatpush.msra.mxu0 0.0
        %491 = vmatpush.msra.mxu0 0.0
        %492 = vmatpush.msra.mxu0 0.0
        %493 = vmatpush.msra.mxu0 0.0
        %494 = vmatpush.msra.mxu0 0.0
        %495 = vmatpush.msra.mxu0 0.0
        %496 = vmatpush.msra.mxu0 0.0
        %497 = vmatpush.msra.mxu0 0.0
        %498 = vmatpush.msra.mxu0 0.0
        %499 = vmatpush.msra.mxu0 0.0
        %500 = vmatpush.msra.mxu0 %v423
        %501 = vmatpush.msra.mxu0 %v422
        %502 = vmatpush.msra.mxu0 %v421
        %503 = vmatpush.msra.mxu0 %v420
        %504 = vmatmul.f32.gmra.mxu0 %v446
        %v505 = vpop.f32.mrf.mxu0
        %v506 = vadd.f32 %v438, %v505
        %507 = vdwg.mxu0
        %508 = vmatpush.msra.mxu0 0.0
        %509 = vmatpush.msra.mxu0 0.0
        %510 = vmatpush.msra.mxu0 0.0
        %511 = vmatpush.msra.mxu0 0.0
        %512 = vmatpush.msra.mxu0 0.0
        %513 = vmatpush.msra.mxu0 0.0
        %514 = vmatpush.msra.mxu0 0.0
        %515 = vmatpush.msra.mxu0 0.0
        %516 = vmatpush.msra.mxu0 0.0
        %517 = vmatpush.msra.mxu0 0.0
        %518 = vmatpush.msra.mxu0 0.0
        %519 = vmatpush.msra.mxu0 0.0
        %520 = vmatpush.msra.mxu0 %v427
        %521 = vmatpush.msra.mxu0 %v426
        %522 = vmatpush.msra.mxu0 %v425
        %523 = vmatpush.msra.mxu0 %v424
        %524 = vmatmul.f32.gmra.mxu0 %v446
        %v525 = vpop.f32.mrf.mxu0
        %v526 = vadd.f32 %v439, %v525
        %527 = vdwg.mxu0
        %v528 = vld [vmem:[%s4] sm:$0xff]
        %v529 = vld [vmem:[%s4 + $0x8] sm:$0xff]
        %v530 = vld [vmem:[%s4 + $0x10] sm:$0xff]
        %v531 = vld [vmem:[%s4 + $0x18] sm:$0xff]
        %v532 = vld [vmem:[%s4 + $0x20] sm:$0xff]
        %v533 = vld [vmem:[%s4 + $0x28] sm:$0xff]
        %v534 = vld [vmem:[%s4 + $0x30] sm:$0xff]
        %v535 = vld [vmem:[%s4 + $0x38] sm:$0xff]
        %v536 = vld [vmem:[%s4 + $0x40] sm:$0xff]
        %v537 = vld [vmem:[%s4 + $0x48] sm:$0xff]
        %v538 = vld [vmem:[%s4 + $0x50] sm:$0xff]
        %v539 = vld [vmem:[%s4 + $0x58] sm:$0xff]
        %v540 = vld [vmem:[%s4 + $0x60] sm:$0xff]
        %v541 = vld [vmem:[%s4 + $0x68] sm:$0xff]
        %v542 = vld [vmem:[%s4 + $0x70] sm:$0xff]
        %v543 = vld [vmem:[%s4 + $0x78] sm:$0xff]
        %v544 = vld [vmem:[%s5] sm:$0x1]
        %v545 = vld [vmem:[%s5 + $0x1] sm:$0x1]
        %v546 = vld [vmem:[%s5 + $0x2] sm:$0x1]
        %v547 = vld [vmem:[%s5 + $0x3] sm:$0x1]
        %v552 = vperm.slane %v544, 0
        %v553 = vperm.slane %v545, 0
        %v554 = vperm.slane %v546, 0
        %v555 = vperm.slane %v547, 0
        %560 = vmatpush.msra.mxu0 0.0
        %561 = vmatpush.msra.mxu0 0.0
        %562 = vmatpush.msra.mxu0 0.0
        %563 = vmatpush.msra.mxu0 0.0
        %564 = vmatpush.msra.mxu0 0.0
        %565 = vmatpush.msra.mxu0 0.0
        %566 = vmatpush.msra.mxu0 0.0
        %567 = vmatpush.msra.mxu0 0.0
        %568 = vmatpush.msra.mxu0 0.0
        %569 = vmatpush.msra.mxu0 0.0
        %570 = vmatpush.msra.mxu0 0.0
        %571 = vmatpush.msra.mxu0 0.0
        %572 = vmatpush.msra.mxu0 %v531
        %573 = vmatpush.msra.mxu0 %v530
        %574 = vmatpush.msra.mxu0 %v529
        %575 = vmatpush.msra.mxu0 %v528
        %576 = vmatmul.f32.gmra.mxu0 %v446
        %v577 = vpop.f32.mrf.mxu0
        %v578 = vadd.f32 %v552, %v577
        %579 = vdwg.mxu0
        %580 = vmatpush.msra.mxu0 0.0
        %581 = vmatpush.msra.mxu0 0.0
        %582 = vmatpush.msra.mxu0 0.0
        %583 = vmatpush.msra.mxu0 0.0
        %584 = vmatpush.msra.mxu0 0.0
        %585 = vmatpush.msra.mxu0 0.0
        %586 = vmatpush.msra.mxu0 0.0
        %587 = vmatpush.msra.mxu0 0.0
        %588 = vmatpush.msra.mxu0 0.0
        %589 = vmatpush.msra.mxu0 0.0
        %590 = vmatpush.msra.mxu0 0.0
        %591 = vmatpush.msra.mxu0 0.0
        %592 = vmatpush.msra.mxu0 %v535
        %593 = vmatpush.msra.mxu0 %v534
        %594 = vmatpush.msra.mxu0 %v533
        %595 = vmatpush.msra.mxu0 %v532
        %596 = vmatmul.f32.gmra.mxu0 %v446
        %v597 = vpop.f32.mrf.mxu0
        %v598 = vadd.f32 %v553, %v597
        %599 = vdwg.mxu0
        %600 = vmatpush.msra.mxu0 0.0
        %601 = vmatpush.msra.mxu0 0.0
        %602 = vmatpush.msra.mxu0 0.0
        %603 = vmatpush.msra.mxu0 0.0
        %604 = vmatpush.msra.mxu0 0.0
        %605 = vmatpush.msra.mxu0 0.0
        %606 = vmatpush.msra.mxu0 0.0
        %607 = vmatpush.msra.mxu0 0.0
        %608 = vmatpush.msra.mxu0 0.0
        %609 = vmatpush.msra.mxu0 0.0
        %610 = vmatpush.msra.mxu0 0.0
        %611 = vmatpush.msra.mxu0 0.0
        %612 = vmatpush.msra.mxu0 %v539
        %613 = vmatpush.msra.mxu0 %v538
        %614 = vmatpush.msra.mxu0 %v537
        %615 = vmatpush.msra.mxu0 %v536
        %616 = vmatmul.f32.gmra.mxu0 %v446
        %v617 = vpop.f32.mrf.mxu0
        %v618 = vadd.f32 %v554, %v617
        %619 = vdwg.mxu0
        %620 = vmatpush.msra.mxu0 0.0
        %621 = vmatpush.msra.mxu0 0.0
        %622 = vmatpush.msra.mxu0 0.0
        %623 = vmatpush.msra.mxu0 0.0
        %624 = vmatpush.msra.mxu0 0.0
        %625 = vmatpush.msra.mxu0 0.0
        %626 = vmatpush.msra.mxu0 0.0
        %627 = vmatpush.msra.mxu0 0.0
        %628 = vmatpush.msra.mxu0 0.0
        %629 = vmatpush.msra.mxu0 0.0
        %630 = vmatpush.msra.mxu0 0.0
        %631 = vmatpush.msra.mxu0 0.0
        %632 = vmatpush.msra.mxu0 %v543
        %633 = vmatpush.msra.mxu0 %v542
        %634 = vmatpush.msra.mxu0 %v541
        %635 = vmatpush.msra.mxu0 %v540
        %636 = vmatmul.f32.gmra.mxu0 %v446
        %v637 = vpop.f32.mrf.mxu0
        %v638 = vadd.f32 %v555, %v637
        %639 = vdwg.mxu0
        %v640 = vld [vmem:[%s6] sm:$0xff]
        %v641 = vld [vmem:[%s6 + $0x8] sm:$0xff]
        %v642 = vld [vmem:[%s6 + $0x10] sm:$0xff]
        %v643 = vld [vmem:[%s6 + $0x18] sm:$0xff]
        %v644 = vld [vmem:[%s6 + $0x20] sm:$0xff]
        %v645 = vld [vmem:[%s6 + $0x28] sm:$0xff]
        %v646 = vld [vmem:[%s6 + $0x30] sm:$0xff]
        %v647 = vld [vmem:[%s6 + $0x38] sm:$0xff]
        %v648 = vld [vmem:[%s6 + $0x40] sm:$0xff]
        %v649 = vld [vmem:[%s6 + $0x48] sm:$0xff]
        %v650 = vld [vmem:[%s6 + $0x50] sm:$0xff]
        %v651 = vld [vmem:[%s6 + $0x58] sm:$0xff]
        %v652 = vld [vmem:[%s6 + $0x60] sm:$0xff]
        %v653 = vld [vmem:[%s6 + $0x68] sm:$0xff]
        %v654 = vld [vmem:[%s6 + $0x70] sm:$0xff]
        %v655 = vld [vmem:[%s6 + $0x78] sm:$0xff]
        %v656 = vld [vmem:[%s7] sm:$0x1]
        %v657 = vld [vmem:[%s7 + $0x1] sm:$0x1]
        %v658 = vld [vmem:[%s7 + $0x2] sm:$0x1]
        %v659 = vld [vmem:[%s7 + $0x3] sm:$0x1]
        %v664 = vperm.slane %v656, 0
        %v665 = vperm.slane %v657, 0
        %v666 = vperm.slane %v658, 0
        %v667 = vperm.slane %v659, 0
        %v673 = vsel %vm444, %v411, 0
        %675 = vmatpush.msra.mxu0 0.0
        %676 = vmatpush.msra.mxu0 0.0
        %677 = vmatpush.msra.mxu0 0.0
        %678 = vmatpush.msra.mxu0 0.0
        %679 = vmatpush.msra.mxu0 0.0
        %680 = vmatpush.msra.mxu0 0.0
        %681 = vmatpush.msra.mxu0 0.0
        %682 = vmatpush.msra.mxu0 0.0
        %683 = vmatpush.msra.mxu0 0.0
        %684 = vmatpush.msra.mxu0 0.0
        %685 = vmatpush.msra.mxu0 0.0
        %686 = vmatpush.msra.mxu0 0.0
        %687 = vmatpush.msra.mxu0 %v643
        %688 = vmatpush.msra.mxu0 %v642
        %689 = vmatpush.msra.mxu0 %v641
        %690 = vmatpush.msra.mxu0 %v640
        %691 = vmatmul.f32.gmra.mxu0 %v673
        %v692 = vpop.f32.mrf.mxu0
        %v693 = vadd.f32 %v664, %v692
        %694 = vdwg.mxu0
        %695 = vmatpush.msra.mxu0 0.0
        %696 = vmatpush.msra.mxu0 0.0
        %697 = vmatpush.msra.mxu0 0.0
        %698 = vmatpush.msra.mxu0 0.0
        %699 = vmatpush.msra.mxu0 0.0
        %700 = vmatpush.msra.mxu0 0.0
        %701 = vmatpush.msra.mxu0 0.0
        %702 = vmatpush.msra.mxu0 0.0
        %703 = vmatpush.msra.mxu0 0.0
        %704 = vmatpush.msra.mxu0 0.0
        %705 = vmatpush.msra.mxu0 0.0
        %706 = vmatpush.msra.mxu0 0.0
        %707 = vmatpush.msra.mxu0 %v647
        %708 = vmatpush.msra.mxu0 %v646
        %709 = vmatpush.msra.mxu0 %v645
        %710 = vmatpush.msra.mxu0 %v644
        %711 = vmatmul.f32.gmra.mxu0 %v673
        %v712 = vpop.f32.mrf.mxu0
        %v713 = vadd.f32 %v665, %v712
        %714 = vdwg.mxu0
        %715 = vmatpush.msra.mxu0 0.0
        %716 = vmatpush.msra.mxu0 0.0
        %717 = vmatpush.msra.mxu0 0.0
        %718 = vmatpush.msra.mxu0 0.0
        %719 = vmatpush.msra.mxu0 0.0
        %720 = vmatpush.msra.mxu0 0.0
        %721 = vmatpush.msra.mxu0 0.0
        %722 = vmatpush.msra.mxu0 0.0
        %723 = vmatpush.msra.mxu0 0.0
        %724 = vmatpush.msra.mxu0 0.0
        %725 = vmatpush.msra.mxu0 0.0
        %726 = vmatpush.msra.mxu0 0.0
        %727 = vmatpush.msra.mxu0 %v651
        %728 = vmatpush.msra.mxu0 %v650
        %729 = vmatpush.msra.mxu0 %v649
        %730 = vmatpush.msra.mxu0 %v648
        %731 = vmatmul.f32.gmra.mxu0 %v673
        %v732 = vpop.f32.mrf.mxu0
        %v733 = vadd.f32 %v666, %v732
        %734 = vdwg.mxu0
        %735 = vmatpush.msra.mxu0 0.0
        %736 = vmatpush.msra.mxu0 0.0
        %737 = vmatpush.msra.mxu0 0.0
        %738 = vmatpush.msra.mxu0 0.0
        %739 = vmatpush.msra.mxu0 0.0
        %740 = vmatpush.msra.mxu0 0.0
        %741 = vmatpush.msra.mxu0 0.0
        %742 = vmatpush.msra.mxu0 0.0
        %743 = vmatpush.msra.mxu0 0.0
        %744 = vmatpush.msra.mxu0 0.0
        %745 = vmatpush.msra.mxu0 0.0
        %746 = vmatpush.msra.mxu0 0.0
        %747 = vmatpush.msra.mxu0 %v655
        %748 = vmatpush.msra.mxu0 %v654
        %749 = vmatpush.msra.mxu0 %v653
        %750 = vmatpush.msra.mxu0 %v652
        %751 = vmatmul.f32.gmra.mxu0 %v673
        %v752 = vpop.f32.mrf.mxu0
        %v753 = vadd.f32 %v667, %v752
        %754 = vdwg.mxu0
        %v755 = vmul.f32 %v466, 0.35355338
        %v756 = vmul.f32 %v486, 0.35355338
        %v757 = vmul.f32 %v506, 0.35355338
        %v758 = vmul.f32 %v526, 0.35355338
        %vm759 = vcmask 64512
        %v761 = vsel %vm759, %v755, 0
        %v764 = vsel %vm759, %v578, 0
        %766 = vmatpush.xpose.msra.mxu0 0.0
        %767 = vmatpush.xpose.msra.mxu0 0.0
        %768 = vmatpush.xpose.msra.mxu0 0.0
        %769 = vmatpush.xpose.msra.mxu0 0.0
        %770 = vmatpush.xpose.msra.mxu0 0.0
        %771 = vmatpush.xpose.msra.mxu0 0.0
        %772 = vmatpush.xpose.msra.mxu0 0.0
        %773 = vmatpush.xpose.msra.mxu0 0.0
        %774 = vmatpush.xpose.msra.mxu0 0.0
        %775 = vmatpush.xpose.msra.mxu0 0.0
        %776 = vmatpush.xpose.msra.mxu0 0.0
        %777 = vmatpush.xpose.msra.mxu0 0.0
        %778 = vmatpush.xpose.msra.mxu0 0.0
        %779 = vmatpush.xpose.msra.mxu0 0.0
        %780 = vmatpush.xpose.msra.mxu0 0.0
        %781 = vmatpush.xpose.msra.mxu0 %v764
        %782 = vmatmul.f32.gmra.mxu0 %v761
        %v783 = vpop.f32.mrf.mxu0
        %v784 = vadd.f32 0.0, %v783
        %785 = vdwg.mxu0
        %v787 = vsel %vm759, %v756, 0
        %v790 = vsel %vm759, %v598, 0
        %792 = vmatpush.xpose.msra.mxu0 0.0
        %793 = vmatpush.xpose.msra.mxu0 0.0
        %794 = vmatpush.xpose.msra.mxu0 0.0
        %795 = vmatpush.xpose.msra.mxu0 0.0
        %796 = vmatpush.xpose.msra.mxu0 0.0
        %797 = vmatpush.xpose.msra.mxu0 0.0
        %798 = vmatpush.xpose.msra.mxu0 0.0
        %799 = vmatpush.xpose.msra.mxu0 0.0
        %800 = vmatpush.xpose.msra.mxu0 0.0
        %801 = vmatpush.xpose.msra.mxu0 0.0
        %802 = vmatpush.xpose.msra.mxu0 0.0
        %803 = vmatpush.xpose.msra.mxu0 0.0
        %804 = vmatpush.xpose.msra.mxu0 0.0
        %805 = vmatpush.xpose.msra.mxu0 0.0
        %806 = vmatpush.xpose.msra.mxu0 0.0
        %807 = vmatpush.xpose.msra.mxu0 %v790
        %808 = vmatmul.f32.gmra.mxu0 %v787
        %v809 = vpop.f32.mrf.mxu0
        %v810 = vadd.f32 0.0, %v809
        %811 = vdwg.mxu0
        %v813 = vsel %vm759, %v757, 0
        %v816 = vsel %vm759, %v618, 0
        %818 = vmatpush.xpose.msra.mxu0 0.0
        %819 = vmatpush.xpose.msra.mxu0 0.0
        %820 = vmatpush.xpose.msra.mxu0 0.0
        %821 = vmatpush.xpose.msra.mxu0 0.0
        %822 = vmatpush.xpose.msra.mxu0 0.0
        %823 = vmatpush.xpose.msra.mxu0 0.0
        %824 = vmatpush.xpose.msra.mxu0 0.0
        %825 = vmatpush.xpose.msra.mxu0 0.0
        %826 = vmatpush.xpose.msra.mxu0 0.0
        %827 = vmatpush.xpose.msra.mxu0 0.0
        %828 = vmatpush.xpose.msra.mxu0 0.0
        %829 = vmatpush.xpose.msra.mxu0 0.0
        %830 = vmatpush.xpose.msra.mxu0 0.0
        %831 = vmatpush.xpose.msra.mxu0 0.0
        %832 = vmatpush.xpose.msra.mxu0 0.0
        %833 = vmatpush.xpose.msra.mxu0 %v816
        %834 = vmatmul.f32.gmra.mxu0 %v813
        %v835 = vpop.f32.mrf.mxu0
        %v836 = vadd.f32 0.0, %v835
        %837 = vdwg.mxu0
        %v839 = vsel %vm759, %v758, 0
        %v842 = vsel %vm759, %v638, 0
        %844 = vmatpush.xpose.msra.mxu0 0.0
        %845 = vmatpush.xpose.msra.mxu0 0.0
        %846 = vmatpush.xpose.msra.mxu0 0.0
        %847 = vmatpush.xpose.msra.mxu0 0.0
        %848 = vmatpush.xpose.msra.mxu0 0.0
        %849 = vmatpush.xpose.msra.mxu0 0.0
        %850 = vmatpush.xpose.msra.mxu0 0.0
        %851 = vmatpush.xpose.msra.mxu0 0.0
        %852 = vmatpush.xpose.msra.mxu0 0.0
        %853 = vmatpush.xpose.msra.mxu0 0.0
        %854 = vmatpush.xpose.msra.mxu0 0.0
        %855 = vmatpush.xpose.msra.mxu0 0.0
        %856 = vmatpush.xpose.msra.mxu0 0.0
        %857 = vmatpush.xpose.msra.mxu0 0.0
        %858 = vmatpush.xpose.msra.mxu0 0.0
        %859 = vmatpush.xpose.msra.mxu0 %v842
        %860 = vmatmul.f32.gmra.mxu0 %v839
        %v861 = vpop.f32.mrf.mxu0
        %v862 = vadd.f32 0.0, %v861
        %863 = vdwg.mxu0
        %v864 = vlaneseq
        %v865 = vshrl.u32 %v864, 7
        %v866 = vlaneseq
        %v867 = vand.u32 %v866, 127
        %vm868 = vcmp.le.s32.totalorder %v867, %v865
        %v869 = vsel %vm868, 1, 0
        %vm870 = vcmp.eq.s32.totalorder %v869, 1
        %v871 = vsel %vm870, %v784, -100000.0
        %v872 = vsel %vm870, %v810, -100000.0
        %v873 = vsel %vm870, %v836, -100000.0
        %v874 = vsel %vm870, %v862, -100000.0
        %v875 = vsel %vm759, %v871, -inf
        %876 = vmax.xlane.f32.xlu0 %v875
        %v877 = vpop.xlane.xlu0 %876
        %v878 = vsel %vm759, %v872, -inf
        %879 = vmax.xlane.f32.xlu0 %v878
        %v880 = vpop.xlane.xlu0 %879
        %v881 = vsel %vm759, %v873, -inf
        %882 = vmax.xlane.f32.xlu0 %v881
        %v883 = vpop.xlane.xlu0 %882
        %v884 = vsel %vm759, %v874, -inf
        %885 = vmax.xlane.f32.xlu0 %v884
        %v886 = vpop.xlane.xlu0 %885
        %v887 = vsub.f32 %v871, %v877
        %v888 = vsub.f32 %v872, %v880
        %v889 = vsub.f32 %v873, %v883
        %v890 = vsub.f32 %v874, %v886
        %v891 = vmul.f32 %v887, 1.442695
        %v892 = vpow.pop %v891
        %v893 = vmul.f32 %v888, 1.442695
        %v894 = vpow.pop %v893
        %v895 = vmul.f32 %v889, 1.442695
        %v896 = vpow.pop %v895
        %v897 = vmul.f32 %v890, 1.442695
        %v898 = vpow.pop %v897
        %v899 = vsel %vm759, %v892, 0.0
        %900 = vadd.xlane.f32.xlu0 %v899
        %v901 = vpop.xlane.xlu0 %900
        %v902 = vsel %vm759, %v894, 0.0
        %903 = vadd.xlane.f32.xlu0 %v902
        %v904 = vpop.xlane.xlu0 %903
        %v905 = vsel %vm759, %v896, 0.0
        %906 = vadd.xlane.f32.xlu0 %v905
        %v907 = vpop.xlane.xlu0 %906
        %v908 = vsel %vm759, %v898, 0.0
        %909 = vadd.xlane.f32.xlu0 %v908
        %v910 = vpop.xlane.xlu0 %909
        %v911 = vrcp.pop %v901
        %v912 = vmul.f32 %v901, %v911
        %v913 = vsub.f32 1.0, %v912
        %v914 = vmul.f32 %v911, %v913
        %v915 = vadd.f32 %v911, %v914
        %vm916 = vweird.f32 %v901
        %vm917 = vweird.f32 %v911
        %vm918 = vmor %vm916, %vm917
        %v919 = vsel %vm918, %v911, %v915
        %v920 = vand.u32 2147483647, %v901
        %vm921 = vcmp.eq.f32.partialorder %v920, 8.507059e+37
        %v922 = vand.u32 %v901, 2147483648
        %v923 = vor.u32 1.1754944e-38, %v922
        %v924 = vsel %vm921, %v923, %v919
        %v925 = vrcp.pop %v904
        %v926 = vmul.f32 %v904, %v925
        %v927 = vsub.f32 1.0, %v926
        %v928 = vmul.f32 %v925, %v927
        %v929 = vadd.f32 %v925, %v928
        %vm930 = vweird.f32 %v904
        %vm931 = vweird.f32 %v925
        %vm932 = vmor %vm930, %vm931
        %v933 = vsel %vm932, %v925, %v929
        %v934 = vand.u32 2147483647, %v904
        %vm935 = vcmp.eq.f32.partialorder %v934, 8.507059e+37
        %v936 = vand.u32 %v904, 2147483648
        %v937 = vor.u32 1.1754944e-38, %v936
        %v938 = vsel %vm935, %v937, %v933
        %v939 = vrcp.pop %v907
        %v940 = vmul.f32 %v907, %v939
        %v941 = vsub.f32 1.0, %v940
        %v942 = vmul.f32 %v939, %v941
        %v943 = vadd.f32 %v939, %v942
        %vm944 = vweird.f32 %v907
        %vm945 = vweird.f32 %v939
        %vm946 = vmor %vm944, %vm945
        %v947 = vsel %vm946, %v939, %v943
        %v948 = vand.u32 2147483647, %v907
        %vm949 = vcmp.eq.f32.partialorder %v948, 8.507059e+37
        %v950 = vand.u32 %v907, 2147483648
        %v951 = vor.u32 1.1754944e-38, %v950
        %v952 = vsel %vm949, %v951, %v947
        %v953 = vrcp.pop %v910
        %v954 = vmul.f32 %v910, %v953
        %v955 = vsub.f32 1.0, %v954
        %v956 = vmul.f32 %v953, %v955
        %v957 = vadd.f32 %v953, %v956
        %vm958 = vweird.f32 %v910
        %vm959 = vweird.f32 %v953
        %vm960 = vmor %vm958, %vm959
        %v961 = vsel %vm960, %v953, %v957
        %v962 = vand.u32 2147483647, %v910
        %vm963 = vcmp.eq.f32.partialorder %v962, 8.507059e+37
        %v964 = vand.u32 %v910, 2147483648
        %v965 = vor.u32 1.1754944e-38, %v964
        %v966 = vsel %vm963, %v965, %v961
        %v967 = vmul.f32 %v892, %v924
        %v968 = vmul.f32 %v894, %v938
        %v969 = vmul.f32 %v896, %v952
        %v970 = vmul.f32 %v898, %v966
        %971 = vst.msk [vmem:[%s401] sm:$0xff] %vm759, %v967
        %972 = vst.msk [vmem:[%s401 + $0x8] sm:$0xff] %vm759, %v968
        %973 = vst.msk [vmem:[%s401 + $0x10] sm:$0xff] %vm759, %v969
        %974 = vst.msk [vmem:[%s401 + $0x18] sm:$0xff] %vm759, %v970
        %v976 = vsel %vm759, %v967, 0
        %978 = vmatpush.msra.mxu0 0.0
        %979 = vmatpush.msra.mxu0 0.0
        %980 = vmatpush.msra.mxu0 0.0
        %981 = vmatpush.msra.mxu0 0.0
        %982 = vmatpush.msra.mxu0 0.0
        %983 = vmatpush.msra.mxu0 0.0
        %984 = vmatpush.msra.mxu0 0.0
        %985 = vmatpush.msra.mxu0 0.0
        %986 = vmatpush.msra.mxu0 0.0
        %987 = vmatpush.msra.mxu0 0.0
        %988 = vmatpush.msra.mxu0 0.0
        %989 = vmatpush.msra.mxu0 0.0
        %990 = vmatpush.msra.mxu0 0.0
        %991 = vmatpush.msra.mxu0 0.0
        %992 = vmatpush.msra.mxu0 0.0
        %993 = vmatpush.msra.mxu0 %v693
        %994 = vmatmul.f32.gmra.mxu0 %v976
        %v995 = vpop.f32.mrf.mxu0
        %v996 = vadd.f32 0.0, %v995
        %997 = vdwg.mxu0
        %v999 = vsel %vm759, %v968, 0
        %1001 = vmatpush.msra.mxu0 0.0
        %1002 = vmatpush.msra.mxu0 0.0
        %1003 = vmatpush.msra.mxu0 0.0
        %1004 = vmatpush.msra.mxu0 0.0
        %1005 = vmatpush.msra.mxu0 0.0
        %1006 = vmatpush.msra.mxu0 0.0
        %1007 = vmatpush.msra.mxu0 0.0
        %1008 = vmatpush.msra.mxu0 0.0
        %1009 = vmatpush.msra.mxu0 0.0
        %1010 = vmatpush.msra.mxu0 0.0
        %1011 = vmatpush.msra.mxu0 0.0
        %1012 = vmatpush.msra.mxu0 0.0
        %1013 = vmatpush.msra.mxu0 0.0
        %1014 = vmatpush.msra.mxu0 0.0
        %1015 = vmatpush.msra.mxu0 0.0
        %1016 = vmatpush.msra.mxu0 %v713
        %1017 = vmatmul.f32.gmra.mxu0 %v999
        %v1018 = vpop.f32.mrf.mxu0
        %v1019 = vadd.f32 0.0, %v1018
        %1020 = vdwg.mxu0
        %v1022 = vsel %vm759, %v969, 0
        %1024 = vmatpush.msra.mxu0 0.0
        %1025 = vmatpush.msra.mxu0 0.0
        %1026 = vmatpush.msra.mxu0 0.0
        %1027 = vmatpush.msra.mxu0 0.0
        %1028 = vmatpush.msra.mxu0 0.0
        %1029 = vmatpush.msra.mxu0 0.0
        %1030 = vmatpush.msra.mxu0 0.0
        %1031 = vmatpush.msra.mxu0 0.0
        %1032 = vmatpush.msra.mxu0 0.0
        %1033 = vmatpush.msra.mxu0 0.0
        %1034 = vmatpush.msra.mxu0 0.0
        %1035 = vmatpush.msra.mxu0 0.0
        %1036 = vmatpush.msra.mxu0 0.0
        %1037 = vmatpush.msra.mxu0 0.0
        %1038 = vmatpush.msra.mxu0 0.0
        %1039 = vmatpush.msra.mxu0 %v733
        %1040 = vmatmul.f32.gmra.mxu0 %v1022
        %v1041 = vpop.f32.mrf.mxu0
        %v1042 = vadd.f32 0.0, %v1041
        %1043 = vdwg.mxu0
        %v1045 = vsel %vm759, %v970, 0
        %1047 = vmatpush.msra.mxu0 0.0
        %1048 = vmatpush.msra.mxu0 0.0
        %1049 = vmatpush.msra.mxu0 0.0
        %1050 = vmatpush.msra.mxu0 0.0
        %1051 = vmatpush.msra.mxu0 0.0
        %1052 = vmatpush.msra.mxu0 0.0
        %1053 = vmatpush.msra.mxu0 0.0
        %1054 = vmatpush.msra.mxu0 0.0
        %1055 = vmatpush.msra.mxu0 0.0
        %1056 = vmatpush.msra.mxu0 0.0
        %1057 = vmatpush.msra.mxu0 0.0
        %1058 = vmatpush.msra.mxu0 0.0
        %1059 = vmatpush.msra.mxu0 0.0
        %1060 = vmatpush.msra.mxu0 0.0
        %1061 = vmatpush.msra.mxu0 0.0
        %1062 = vmatpush.msra.mxu0 %v753
        %1063 = vmatmul.f32.gmra.mxu0 %v1045
        %v1064 = vpop.f32.mrf.mxu0
        %v1065 = vadd.f32 0.0, %v1064
        %1066 = vdwg.mxu0
        %v1067 = vld [vmem:[%s8] sm:$0xff]
        %v1068 = vld [vmem:[%s8 + $0x8] sm:$0xff]
        %v1069 = vld [vmem:[%s8 + $0x10] sm:$0xff]
        %v1070 = vld [vmem:[%s8 + $0x18] sm:$0xff]
        %v1072 = vsel %vm759, %v996, 0
        %1074 = vmatpush.msra.mxu0 0.0
        %1075 = vmatpush.msra.mxu0 0.0
        %1076 = vmatpush.msra.mxu0 0.0
        %1077 = vmatpush.msra.mxu0 0.0
        %1078 = vmatpush.msra.mxu0 0.0
        %1079 = vmatpush.msra.mxu0 0.0
        %1080 = vmatpush.msra.mxu0 0.0
        %1081 = vmatpush.msra.mxu0 0.0
        %1082 = vmatpush.msra.mxu0 0.0
        %1083 = vmatpush.msra.mxu0 0.0
        %1084 = vmatpush.msra.mxu0 0.0
        %1085 = vmatpush.msra.mxu0 0.0
        %1086 = vmatpush.msra.mxu0 0.0
        %1087 = vmatpush.msra.mxu0 0.0
        %1088 = vmatpush.msra.mxu0 0.0
        %1089 = vmatpush.msra.mxu0 %v1067
        %1090 = vmatmul.f32.gmra.mxu0 %v1072
        %v1091 = vpop.f32.mrf.mxu0
        %v1092 = vadd.f32 0.0, %v1091
        %1093 = vdwg.mxu0
        %v1095 = vsel %vm759, %v1019, 0
        %1097 = vmatpush.msra.mxu0 0.0
        %1098 = vmatpush.msra.mxu0 0.0
        %1099 = vmatpush.msra.mxu0 0.0
        %1100 = vmatpush.msra.mxu0 0.0
        %1101 = vmatpush.msra.mxu0 0.0
        %1102 = vmatpush.msra.mxu0 0.0
        %1103 = vmatpush.msra.mxu0 0.0
        %1104 = vmatpush.msra.mxu0 0.0
        %1105 = vmatpush.msra.mxu0 0.0
        %1106 = vmatpush.msra.mxu0 0.0
        %1107 = vmatpush.msra.mxu0 0.0
        %1108 = vmatpush.msra.mxu0 0.0
        %1109 = vmatpush.msra.mxu0 0.0
        %1110 = vmatpush.msra.mxu0 0.0
        %1111 = vmatpush.msra.mxu0 0.0
        %1112 = vmatpush.msra.mxu0 %v1068
        %1113 = vmatmul.f32.gmra.mxu0 %v1095
        %v1114 = vpop.f32.mrf.mxu0
        %v1115 = vadd.f32 0.0, %v1114
        %1116 = vdwg.mxu0
        %v1118 = vsel %vm759, %v1042, 0
        %1120 = vmatpush.msra.mxu0 0.0
        %1121 = vmatpush.msra.mxu0 0.0
        %1122 = vmatpush.msra.mxu0 0.0
        %1123 = vmatpush.msra.mxu0 0.0
        %1124 = vmatpush.msra.mxu0 0.0
        %1125 = vmatpush.msra.mxu0 0.0
        %1126 = vmatpush.msra.mxu0 0.0
        %1127 = vmatpush.msra.mxu0 0.0
        %1128 = vmatpush.msra.mxu0 0.0
        %1129 = vmatpush.msra.mxu0 0.0
        %1130 = vmatpush.msra.mxu0 0.0
        %1131 = vmatpush.msra.mxu0 0.0
        %1132 = vmatpush.msra.mxu0 0.0
        %1133 = vmatpush.msra.mxu0 0.0
        %1134 = vmatpush.msra.mxu0 0.0
        %1135 = vmatpush.msra.mxu0 %v1069
        %1136 = vmatmul.f32.gmra.mxu0 %v1118
        %v1137 = vpop.f32.mrf.mxu0
        %v1138 = vadd.f32 0.0, %v1137
        %1139 = vdwg.mxu0
        %v1141 = vsel %vm759, %v1065, 0
        %1143 = vmatpush.msra.mxu0 0.0
        %1144 = vmatpush.msra.mxu0 0.0
        %1145 = vmatpush.msra.mxu0 0.0
        %1146 = vmatpush.msra.mxu0 0.0
        %1147 = vmatpush.msra.mxu0 0.0
        %1148 = vmatpush.msra.mxu0 0.0
        %1149 = vmatpush.msra.mxu0 0.0
        %1150 = vmatpush.msra.mxu0 0.0
        %1151 = vmatpush.msra.mxu0 0.0
        %1152 = vmatpush.msra.mxu0 0.0
        %1153 = vmatpush.msra.mxu0 0.0
        %1154 = vmatpush.msra.mxu0 0.0
        %1155 = vmatpush.msra.mxu0 0.0
        %1156 = vmatpush.msra.mxu0 0.0
        %1157 = vmatpush.msra.mxu0 0.0
        %1158 = vmatpush.msra.mxu0 %v1070
        %1159 = vmatmul.f32.gmra.mxu0 %v1141
        %v1160 = vpop.f32.mrf.mxu0
        %v1161 = vadd.f32 0.0, %v1160
        %1162 = vdwg.mxu0
        %v1163 = vsel %vm444, %v1092, 0.0
        %v1164 = vsel %vm444, %v1115, 0.0
        %v1165 = vadd.f32 %v1163, %v1164
        %v1166 = vsel %vm444, %v1138, 0.0
        %v1167 = vadd.f32 %v1165, %v1166
        %v1168 = vsel %vm444, %v1161, 0.0
        %v1169 = vadd.f32 %v1167, %v1168
        %v1170 = vld [vmem:[%s9] sm:$0x1]
        %v1172 = vperm.slane %v1170, 0
        %v1174 = vadd.f32 %v1169, %v1172
        %1175 = vst.msk [vmem:[%s394] sm:$0xff] %vm444, %v1174
        %s1176 = sand.u32 %s257, 1
        %s1177 = scalar_lea.sflag [#allocation3], %s1176
        %s1178 = sand.u32 %s257, 1
        %s1179 = smul.addr %s1178, 8
        %s1180 = scalar_lea.vmem [#allocation2], %s1179
        %s1181 = sand.u32 %s283, 1
        %s1182 = scalar_lea.sflag [#allocation5], %s1181
        %s1183 = sand.u32 %s283, 1
        %s1184 = smul.addr %s1183, 32
        %s1185 = scalar_lea.vmem [#allocation4], %s1184
        // Predicated region
        $region61: #{decoder_attention_forward.1} parent=59 // pred_check
          %p1186 = pneg %p267
        $region62: #{decoder_attention_forward.1} parent=59 // pred_check_branch
          %1188 = sbr.rel (%p1186) target = $region64
        $region63: #{decoder_attention_forward.1} parent=59 // pred_region
          %1190 = vsyncadd %s1177, 0
          %s1191 = smul.addr %s29, 8
          %s1192 = scalar_lea.hbm %s10, %s1191
          %s1194 = sshll.u32 %s1180, 4
          %s1195 = int_to_ptr.vmem [resolvable:$true] %s1194
          %s1196 = sshll.u32 %s1192, 4
          %s1197 = int_to_ptr.hbm [resolvable:$true] %s1196
          %1199 = dma.vmem_to_hbm [thread:$0]  %s1195, 128, %s1197, %s1177
        $region64: #{decoder_attention_forward.1} parent=59 // pred_fallthru
          _
        // Predicated region
        $region65: #{decoder_attention_forward.1} parent=59 // pred_check
          %p1200 = pneg %p293
        $region66: #{decoder_attention_forward.1} parent=59 // pred_check_branch
          %1202 = sbr.rel (%p1200) target = $region68
        $region67: #{decoder_attention_forward.1} parent=59 // pred_region
          %1204 = vsyncadd %s1182, 0
          %s1205 = smul.addr %s29, 4
          %s1206 = smul.addr %s1205, 8
          %s1207 = scalar_lea.hbm %s11, %s1206
          %s1208 = sshll.u32 %s1185, 4
          %s1209 = int_to_ptr.vmem [resolvable:$true] %s1208
          %s1210 = sshll.u32 %s1207, 4
          %s1211 = int_to_ptr.hbm [resolvable:$true] %s1210
          %1216 = dma.vmem_to_hbm [thread:$0]  %s1209, 512, %s1211, %s1182, 128, 128, 8
        $region68: #{decoder_attention_forward.1} parent=59 // pred_fallthru
          _
      $region60: #{decoder_attention_forward.1} parent=5 // pred_fallthru
        _
      %p1217 = scmp.le.s32.totalorder 2, %s24
      // Predicated region
      $region69: #{decoder_attention_forward.1} parent=5 // pred_check
        %p1218 = pneg %p1217
      $region70: #{decoder_attention_forward.1} parent=5 // pred_check_branch
        %1220 = sbr.rel (%p1218) target = $region72
      $region71: #{decoder_attention_forward.1} parent=5 // pred_region
        %s1221 = ssub.s32 %s24, 2
        // Predicated region
        $region73: #{decoder_attention_forward.1} parent=71 // pred_check
          %p1222 = pneg %p273
        $region74: #{decoder_attention_forward.1} parent=71 // pred_check_branch
          %1224 = sbr.rel (%p1222) target = $region76
        $region75: #{decoder_attention_forward.1} parent=71 // pred_region
          %s1225 = sand.u32 %s258, 1
          %s1226 = scalar_lea.sflag [#allocation3], %s1225
          %s1227 = sand.u32 %s258, 1
          %s1228 = smul.addr %s1227, 8
          %s1229 = scalar_lea.vmem [#allocation2], %s1228
          %1231 = dma.done %s1226, 128
        $region76: #{decoder_attention_forward.1} parent=71 // pred_fallthru
          _
        // Predicated region
        $region77: #{decoder_attention_forward.1} parent=71 // pred_check
          %p1232 = pneg %p299
        $region78: #{decoder_attention_forward.1} parent=71 // pred_check_branch
          %1234 = sbr.rel (%p1232) target = $region80
        $region79: #{decoder_attention_forward.1} parent=71 // pred_region
          %s1235 = sand.u32 %s284, 1
          %s1236 = scalar_lea.sflag [#allocation5], %s1235
          %s1237 = sand.u32 %s284, 1
          %s1238 = smul.addr %s1237, 32
          %s1239 = scalar_lea.vmem [#allocation4], %s1238
          %1241 = dma.done %s1236, 512
        $region80: #{decoder_attention_forward.1} parent=71 // pred_fallthru
          _
      $region72: #{decoder_attention_forward.1} parent=5 // pred_fallthru
        _
    $region6: #{decoder_attention_forward.1} parent=1 // loop_footer
      %s28 = sadd.s32 1, %s24
    $region7: #{decoder_attention_forward.1} parent=1 // loop_footer_branch
      %23 = sbr.rel target = $region3
    $region8: #{decoder_attention_forward.1} parent=1 // loop_exit
      _
    %1242 = vsyncpa [#allocation3], 1
    %s1243 = scalar_lea.sflag [#allocation3], 1
    %1244 = vsyncpa %s1243, 1
    %1245 = vsyncpa [#allocation5], 1
    %s1246 = scalar_lea.sflag [#allocation5], 1
    %1247 = vsyncpa %s1246, 1

</llo_original>
